<compile_context>
chip_gen: v7x
topology: tpu7x:2x2x1
jax: 0.10.0
libtpu: 0.0.40
codegen_flags: <defaults>
</compile_context>

<pallas_src>
import functools

import numpy as np
import jax
import jax.numpy as jnp
from jax.experimental import pallas as pl
from jax.experimental.pallas import tpu as pltpu

# ---------------------------------------------------------------------------
# Problem configuration (synthetic stand-in for Ec / network_sol / network_test)
# ---------------------------------------------------------------------------
D_IN = 2            # spatial-temporal input dim of the PINN networks
HID = 32            # hidden width of both networks
D_OUT = 1           # scalar solution / test function
NB = 8              # number of boundary points   (x_b_train)
NU = 8              # number of initial points    (x_u_train)
NF = 256            # number of collocation pts   (x_f_train) -- amortizes launch cost

P_EXP = 2.0                 # Ec.p   (kernel exploits p == 2:  |d|**2 == d*d)
LAMBDA_RES = 10.0           # network_sol.lambda_residual
LAMBDA_REG_SOL = 1e-4       # network_sol.regularization_param
LAMBDA_REG_TEST = 1e-4      # network_test.regularization_param

# Row layout of the packed parameter slab (all multi-row blocks 8-aligned):
R_W1 = 0      # rows [0, 8)        : stacked W1, zero-padded to 8 rows (layer-1 MXU RHS)
R_B1 = 8      # row 8              : stacked b1
R_B2 = 9      # row 9              : stacked b2
R_W3S = 10    # row 10             : sol  W3^T in lanes [0, HID)      (regularization only)
R_W3T = 11    # row 11             : test W3^T in lanes [HID, 2*HID)  (regularization only)
R_B3 = 12     # row 12             : b3 (sol at lane 0, test at lane HID)
R_W2 = 16     # rows [16, 16+2HID) : block-diagonal stacked W2 (layer-2 MXU RHS)


def _round_up(n, m):
    return ((n + m - 1) // m) * m


# ---------------------------------------------------------------------------
# Pallas kernel: full CustomLoss.forward (minimizing branch) in one invocation
# ---------------------------------------------------------------------------
def _custom_loss_kernel(data_ref, p_ref, w3_ref, sel_ref, out_ref, *, hid,
                        n_sup, n_f, lambda_res, lambda_reg_sol, lambda_reg_test):
    """data_ref : (n_pad, 9) VMEM   cols 0:D_IN = x (cols D_IN:8 zero), col 8 = target u
       p_ref    : (rows_pad, 2*hid) VMEM packed parameter slab (layout above)
       w3_ref   : (w3_rows, 2) VMEM  rows 0:2h = [sW3 | 0 ; 0 | tW3], row 2h = [sb3, tb3]
       sel_ref  : (8, rows_pad) VMEM constant regularization group selector
       out_ref  : (4,) SMEM  -- loss_v, loss_vars, loss_pde, loss_pde_no_norm
    """
    wide = 2 * hid

    # ---- stacked (sol | test) MLP over ALL points, every layer on the MXU ----
    x8 = data_ref[:, 0:8]                                    # (n_pad, 8), cols>=D_IN are 0
    h1 = jnp.tanh(jnp.dot(x8, p_ref[R_W1:R_W1 + 8, :],
                          preferred_element_type=jnp.float32)
                  + p_ref[R_B1:R_B1 + 1, :])                 # (n_pad, 2h)
    h2 = jnp.tanh(jnp.dot(h1, p_ref[R_W2:R_W2 + wide, :],
                          preferred_element_type=jnp.float32)
                  + p_ref[R_B2:R_B2 + 1, :])                 # (n_pad, 2h)
    upair = (jnp.dot(h2, w3_ref[0:wide, :], preferred_element_type=jnp.float32)
             + w3_ref[wide:wide + 1, :])                     # (n_pad, 2) = [u_sol, u_test]

    # ---- Ec.apply_bc / Ec.apply_ic : data-fit loss on the first n_sup rows ----
    d = upair[0:n_sup, 0:1] - data_ref[0:n_sup, 8:9]
    loss_vars = jnp.sum(d * d) * (1.0 / float(n_sup))        # mean(|.|**p), p == 2

    # ---- Ec.compute_res on the collocation rows -------------------------------
    # TODO(synk): synthesized weak-form (variational) residual stand-in.
    u_sol_f = upair[n_sup:n_sup + n_f, 0:1]
    u_test_f = upair[n_sup:n_sup + n_f, 1:2]
    num = jnp.sum(u_sol_f * u_test_f) * (1.0 / float(n_f))
    den = jnp.sum(u_test_f * u_test_f) * (1.0 / float(n_f)) + 1e-12
    loss_pde_no_norm = num * num
    loss_pde = loss_pde_no_norm / den

    # ---- regularization(model, 2): sum of per-parameter-tensor L2 norms -------
    # One constant-selector matmul on the idle MXU yields per-group, per-lane
    # sums of squares; lane split recovers sol vs test; safe-sqrt keeps the
    # (eventual) gradient finite for the empty padding groups.
    p = p_ref[...]
    gsum = jnp.dot(sel_ref[...], p * p, preferred_element_type=jnp.float32)  # (8, 2h)
    ss_sol = jnp.sum(gsum[:, 0:hid], axis=1, keepdims=True)                   # (8, 1)
    ss_test = jnp.sum(gsum[:, hid:wide], axis=1, keepdims=True)               # (8, 1)

    def _safe_norms(ss):
        return jnp.where(ss > 0.0, jnp.sqrt(jnp.maximum(ss, 1e-30)), 0.0)

    loss_reg_sol = jnp.sum(_safe_norms(ss_sol))
    loss_reg_test = jnp.sum(_safe_norms(ss_test))

    # ---- total loss (minimizing branch) ---------------------------------------
    loss_v = (lambda_res * loss_vars + loss_pde
              + lambda_reg_sol * loss_reg_sol + lambda_reg_test * loss_reg_test)

    out_ref[0] = loss_v
    out_ref[1] = loss_vars
    out_ref[2] = loss_pde
    out_ref[3] = loss_pde_no_norm


# ---------------------------------------------------------------------------
# Constant regularization selector (compile-time, cached on the host)
# ---------------------------------------------------------------------------
@functools.lru_cache(maxsize=None)
def _reg_selector(d_in, hid, rows_pad):
    wide = 2 * hid
    gid = np.full((rows_pad,), 7, np.int32)          # group 7 = padding (never selected)
    gid[0:d_in] = 0                                  # W1
    gid[R_B1] = 1                                    # b1
    gid[R_B2] = 2                                    # b2
    gid[R_W3S] = 3                                   # W3 (sol row)
    gid[R_W3T] = 3                                   # W3 (test row)
    gid[R_B3] = 4                                    # b3
    gid[R_W2:R_W2 + wide] = 5                        # W2 (block-diagonal)
    sel = (gid[None, :] == np.arange(8)[:, None]).astype(np.float32)
    sel[7, :] = 0.0                                  # padding group contributes nothing
    return sel


# ---------------------------------------------------------------------------
# One-time packing (hoist out of the training loop; pure concatenates)
# ---------------------------------------------------------------------------
def pack_params(sol_params, test_params):
    """Pack both 3-layer MLPs into (p_slab, w3pair). Call once; reuse per step."""
    sW1, sb1, sW2, sb2, sW3, sb3 = [jnp.asarray(a, jnp.float32) for a in sol_params]
    tW1, tb1, tW2, tb2, tW3, tb3 = [jnp.asarray(a, jnp.float32) for a in test_params]
    d_in, hid = sW1.shape
    assert d_in <= 8, "layer-1 packing assumes input dim <= 8"
    assert sW3.shape[1] == 1 and tW3.shape[1] == 1, "kernel assumes scalar net output"
    wide = 2 * hid
    f32 = jnp.float32
    zh = jnp.zeros((hid, hid), f32)
    z1h = jnp.zeros((1, hid), f32)

    w1_blk = jnp.concatenate([jnp.concatenate([sW1, tW1], axis=1),
                              jnp.zeros((8 - d_in, wide), f32)], axis=0)        # rows 0:8
    b1_row = jnp.concatenate([sb1, tb1], axis=1)                                # row 8
    b2_row = jnp.concatenate([sb2, tb2], axis=1)                                # row 9
    w3s_row = jnp.concatenate([sW3.T, z1h], axis=1)                             # row 10
    w3t_row = jnp.concatenate([z1h, tW3.T], axis=1)                             # row 11
    b3_row = jnp.concatenate([sb3, jnp.zeros((1, hid - 1), f32),
                              tb3, jnp.zeros((1, hid - 1), f32)], axis=1)       # row 12
    pad13_16 = jnp.zeros((R_W2 - (R_B3 + 1), wide), f32)                        # rows 13:16
    w2_blk = jnp.concatenate([jnp.concatenate([sW2, zh], axis=1),
                              jnp.concatenate([zh, tW2], axis=1)], axis=0)      # rows 16:16+2h
    p = jnp.concatenate([w1_blk, b1_row, b2_row, w3s_row, w3t_row, b3_row,
                         pad13_16, w2_blk], axis=0)
    rows_pad = _round_up(p.shape[0], 8)
    if rows_pad != p.shape[0]:
        p = jnp.concatenate([p, jnp.zeros((rows_pad - p.shape[0], wide), f32)], axis=0)

    w3_rows = _round_up(wide + 1, 8)
    w3pair = jnp.concatenate([
        jnp.concatenate([sW3, jnp.zeros((hid, 1), f32)], axis=1),               # rows 0:h
        jnp.concatenate([jnp.zeros((hid, 1), f32), tW3], axis=1),               # rows h:2h
        jnp.concatenate([sb3, tb3], axis=1),                                    # row 2h
        jnp.zeros((w3_rows - (wide + 1), 2), f32)], axis=0)
    return p, w3pair, d_in, hid


def pack_data(x_b, u_b, x_u, u_u, x_f):
    """One lane-dense (n_pad, 9) buffer: x padded to 8 lanes + supervised u in lane 8."""
    d_in = x_b.shape[1]
    f32 = jnp.float32
    if x_u.shape[0] != 0:            # the x_u_train.shape[0] != 0 branch (static)
        x_sup = jnp.concatenate([x_b, x_u], axis=0)
        u_sup = jnp.concatenate([u_b, u_u], axis=0)
    else:
        x_sup, u_sup = x_b, u_b
    x_all = jnp.concatenate([x_sup, x_f], axis=0).astype(f32)                   # (n, d_in)
    n, n_sup, n_f = x_all.shape[0], x_sup.shape[0], x_f.shape[0]
    x8 = jnp.concatenate([x_all, jnp.zeros((n, 8 - d_in), f32)], axis=1)        # (n, 8)
    u_col = jnp.concatenate([u_sup.astype(f32)[:, 0:1],
                             jnp.zeros((n - n_sup, 1), f32)], axis=0)           # (n, 1)
    data = jnp.concatenate([x8, u_col], axis=1)                                 # (n, 9)
    n_pad = _round_up(n, 8)
    if n_pad != n:
        data = jnp.concatenate([data, jnp.zeros((n_pad - n, 9), f32)], axis=0)
    return data, n_sup, n_f


# ---------------------------------------------------------------------------
# Loss entry points
# ---------------------------------------------------------------------------
def custom_loss_packed(data, p_slab, w3pair, *, d_in, hid, n_sup, n_f,
                       minimizing=True):
    """Hot path: takes already-packed buffers (pack once, reuse every call)."""
    rows_pad = p_slab.shape[0]
    sel = jnp.asarray(_reg_selector(int(d_in), int(hid), int(rows_pad)))

    kernel = functools.partial(
        _custom_loss_kernel, hid=hid, n_sup=n_sup, n_f=n_f,
        lambda_res=LAMBDA_RES, lambda_reg_sol=LAMBDA_REG_SOL,
        lambda_reg_test=LAMBDA_REG_TEST)

    vmem = pl.BlockSpec(memory_space=pltpu.MemorySpace.VMEM)
    out = pl.pallas_call(
        kernel,
        out_shape=jax.ShapeDtypeStruct((4,), jnp.float32),
        in_specs=[vmem, vmem, vmem, vmem],
        out_specs=pl.BlockSpec(memory_space=pltpu.MemorySpace.SMEM),
    )(data, p_slab, w3pair, sel)

    loss_v, loss_vars, loss_pde, loss_pde_no_norm = out[0], out[1], out[2], out[3]
    if minimizing:
        return loss_v, loss_vars, loss_pde, loss_pde_no_norm
    # maximizing branch: loss_v = -log(loss_pde) (wrapper glue, outside the kernel)
    return -jnp.log(loss_pde), 0, 0, [0, 0, 0], loss_pde_no_norm


def custom_loss(x_u_train, u_train, x_b_train, u_b_train, x_f_train,
                sol_params, test_params, minimizing=True):
    """Convenience wrapper mirroring CustomLoss.forward (packs every call)."""
    assert P_EXP == 2.0, "kernel specialises Ec.p == 2 (|d|**p -> d*d)"
    data, n_sup, n_f = pack_data(x_b_train, u_b_train, x_u_train, u_train, x_f_train)
    p_slab, w3pair, d_in, hid = pack_params(sol_params, test_params)
    return custom_loss_packed(data, p_slab, w3pair, d_in=d_in, hid=hid,
                              n_sup=n_sup, n_f=n_f, minimizing=minimizing)


# ---------------------------------------------------------------------------
# Deterministic parameter / data construction
# ---------------------------------------------------------------------------
def _make_mlp_params(key):
    ks = jax.random.split(key, 6)
    W1 = jax.random.normal(ks[0], (D_IN, HID), jnp.float32) * 0.5
    b1 = jax.random.normal(ks[1], (1, HID), jnp.float32) * 0.1
    W2 = jax.random.normal(ks[2], (HID, HID), jnp.float32) * (1.0 / jnp.sqrt(HID))
    b2 = jax.random.normal(ks[3], (1, HID), jnp.float32) * 0.1
    W3 = jax.random.normal(ks[4], (HID, D_OUT), jnp.float32) * (1.0 / jnp.sqrt(HID))
    b3 = jax.random.normal(ks[5], (1, D_OUT), jnp.float32) * 0.1
    return (W1, b1, W2, b2, W3, b3)


if __name__ == "__main__":
    key = jax.random.PRNGKey(0)
    k_data, k_sol, k_test = jax.random.split(key, 3)
    kd = jax.random.split(k_data, 5)

    x_b_train = jax.random.uniform(kd[0], (NB, D_IN), jnp.float32)
    u_b_train = jax.random.normal(kd[1], (NB, D_OUT), jnp.float32)
    x_u_train = jax.random.uniform(kd[2], (NU, D_IN), jnp.float32)
    u_train = jax.random.normal(kd[3], (NU, D_OUT), jnp.float32)
    x_f_train = jax.random.uniform(kd[4], (NF, D_IN), jnp.float32)

    sol_params = _make_mlp_params(k_sol)
    test_params = _make_mlp_params(k_test)

    # Pack ONCE (hoisted out of the per-step path), then call the jitted loss.
    data, n_sup, n_f = pack_data(x_b_train, u_b_train, x_u_train, u_train, x_f_train)
    p_slab, w3pair, d_in, hid = pack_params(sol_params, test_params)

    loss_fn = jax.jit(functools.partial(
        custom_loss_packed, d_in=d_in, hid=hid, n_sup=n_sup, n_f=n_f,
        minimizing=True))

    loss_v, loss_vars, loss_pde, loss_pde_no_norm = loss_fn(data, p_slab, w3pair)
    jax.block_until_ready((loss_v, loss_vars, loss_pde, loss_pde_no_norm))
    print("KERNEL_OK")
</pallas_src>

<mosaic_0001>
module attributes {stable_mosaic.version = 11 : i64} {
  func.func @_custom_loss_kernel(%arg0: memref<272x9xf32, #tpu.memory_space<vmem>>, %arg1: memref<80x64xf32, #tpu.memory_space<vmem>>, %arg2: memref<72x2xf32, #tpu.memory_space<vmem>>, %arg3: memref<8x80xf32, #tpu.memory_space<vmem>>, %arg4: memref<4xf32, #tpu.memory_space<smem>>) attributes {dimension_semantics = [], scalar_prefetch = 0 : i64, scratch_operands = 0 : i64, tpu.core_type = #tpu.core_type<tc>} {
    %c0 = arith.constant 0 : index
    %c0_0 = arith.constant 0 : index
    %0 = vector.load %arg0[%c0, %c0_0] : memref<272x9xf32, #tpu.memory_space<vmem>>, vector<272x8xf32>
    %c0_1 = arith.constant 0 : index
    %c0_2 = arith.constant 0 : index
    %1 = vector.load %arg1[%c0_1, %c0_2] : memref<80x64xf32, #tpu.memory_space<vmem>>, vector<8x64xf32>
    %cst = arith.constant dense<0.000000e+00> : vector<272x64xf32>
    %2 = tpu.matmul %0, %1, %cst {dimension_numbers = #tpu.dot_dimension_numbers<[1], [0], [0], [1], [0, 0, 1, 1], [], []>} : vector<272x8xf32>, vector<8x64xf32>, vector<272x64xf32> -> vector<272x64xf32>
    %c8 = arith.constant 8 : index
    %c0_3 = arith.constant 0 : index
    %3 = vector.load %arg1[%c8, %c0_3] : memref<80x64xf32, #tpu.memory_space<vmem>>, vector<1x64xf32>
    %4 = vector.broadcast %3 : vector<1x64xf32> to vector<272x64xf32>
    %5 = arith.addf %2, %4 : vector<272x64xf32>
    %6 = math.tanh %5 : vector<272x64xf32>
    %c16 = arith.constant 16 : index
    %c0_4 = arith.constant 0 : index
    %7 = vector.load %arg1[%c16, %c0_4] : memref<80x64xf32, #tpu.memory_space<vmem>>, vector<64x64xf32>
    %cst_5 = arith.constant dense<0.000000e+00> : vector<272x64xf32>
    %8 = tpu.matmul %6, %7, %cst_5 {dimension_numbers = #tpu.dot_dimension_numbers<[1], [0], [0], [1], [0, 0, 1, 1], [], []>} : vector<272x64xf32>, vector<64x64xf32>, vector<272x64xf32> -> vector<272x64xf32>
    %c9 = arith.constant 9 : index
    %c0_6 = arith.constant 0 : index
    %9 = vector.load %arg1[%c9, %c0_6] : memref<80x64xf32, #tpu.memory_space<vmem>>, vector<1x64xf32>
    %10 = vector.broadcast %9 : vector<1x64xf32> to vector<272x64xf32>
    %11 = arith.addf %8, %10 : vector<272x64xf32>
    %12 = math.tanh %11 : vector<272x64xf32>
    %c0_7 = arith.constant 0 : index
    %c0_8 = arith.constant 0 : index
    %13 = vector.load %arg2[%c0_7, %c0_8] : memref<72x2xf32, #tpu.memory_space<vmem>>, vector<64x2xf32>
    %cst_9 = arith.constant dense<0.000000e+00> : vector<272x2xf32>
    %14 = tpu.matmul %12, %13, %cst_9 {dimension_numbers = #tpu.dot_dimension_numbers<[1], [0], [0], [1], [0, 0, 1, 1], [], []>} : vector<272x64xf32>, vector<64x2xf32>, vector<272x2xf32> -> vector<272x2xf32>
    %c64 = arith.constant 64 : index
    %c0_10 = arith.constant 0 : index
    %15 = vector.load %arg2[%c64, %c0_10] : memref<72x2xf32, #tpu.memory_space<vmem>>, vector<1x2xf32>
    %16 = vector.broadcast %15 : vector<1x2xf32> to vector<272x2xf32>
    %17 = arith.addf %14, %16 : vector<272x2xf32>
    %18 = vector.extract_strided_slice %17 {offsets = [0, 0], sizes = [16, 1], strides = [1, 1]} : vector<272x2xf32> to vector<16x1xf32>
    %c0_11 = arith.constant 0 : index
    %c8_12 = arith.constant 8 : index
    %19 = vector.load %arg0[%c0_11, %c8_12] : memref<272x9xf32, #tpu.memory_space<vmem>>, vector<16x1xf32>
    %20 = arith.subf %18, %19 : vector<16x1xf32>
    %21 = arith.mulf %20, %20 : vector<16x1xf32>
    %22 = vector.shape_cast %21 : vector<16x1xf32> to vector<1x16x1xf32>
    %cst_13 = arith.constant dense<0.000000e+00> : vector<1xf32>
    %23 = vector.multi_reduction <add>, %22, %cst_13 [1, 2] : vector<1x16x1xf32> to vector<1xf32>
    %24 = vector.shape_cast %23 : vector<1xf32> to vector<1x1x1xf32>
    %25 = vector.extract %24[0, 0, 0] : f32 from vector<1x1x1xf32>
    %cst_14 = arith.constant 6.250000e-02 : f32
    %26 = arith.mulf %25, %cst_14 : f32
    %27 = vector.extract_strided_slice %17 {offsets = [16, 0], sizes = [256, 1], strides = [1, 1]} : vector<272x2xf32> to vector<256x1xf32>
    %28 = vector.extract_strided_slice %17 {offsets = [16, 1], sizes = [256, 1], strides = [1, 1]} : vector<272x2xf32> to vector<256x1xf32>
    %29 = arith.mulf %27, %28 : vector<256x1xf32>
    %30 = vector.shape_cast %29 : vector<256x1xf32> to vector<1x256x1xf32>
    %cst_15 = arith.constant dense<0.000000e+00> : vector<1xf32>
    %31 = vector.multi_reduction <add>, %30, %cst_15 [1, 2] : vector<1x256x1xf32> to vector<1xf32>
    %32 = vector.shape_cast %31 : vector<1xf32> to vector<1x1x1xf32>
    %33 = vector.extract %32[0, 0, 0] : f32 from vector<1x1x1xf32>
    %cst_16 = arith.constant 3.906250e-03 : f32
    %34 = arith.mulf %33, %cst_16 : f32
    %35 = arith.mulf %28, %28 : vector<256x1xf32>
    %36 = vector.shape_cast %35 : vector<256x1xf32> to vector<1x256x1xf32>
    %cst_17 = arith.constant dense<0.000000e+00> : vector<1xf32>
    %37 = vector.multi_reduction <add>, %36, %cst_17 [1, 2] : vector<1x256x1xf32> to vector<1xf32>
    %38 = vector.shape_cast %37 : vector<1xf32> to vector<1x1x1xf32>
    %39 = vector.extract %38[0, 0, 0] : f32 from vector<1x1x1xf32>
    %cst_18 = arith.constant 3.906250e-03 : f32
    %40 = arith.mulf %39, %cst_18 : f32
    %cst_19 = arith.constant 9.99999996E-13 : f32
    %41 = arith.addf %40, %cst_19 : f32
    %42 = arith.mulf %34, %34 : f32
    %43 = arith.divf %42, %41 : f32
    %c0_20 = arith.constant 0 : index
    %c0_21 = arith.constant 0 : index
    %44 = vector.load %arg1[%c0_20, %c0_21] : memref<80x64xf32, #tpu.memory_space<vmem>>, vector<80x64xf32>
    %c0_22 = arith.constant 0 : index
    %c0_23 = arith.constant 0 : index
    %45 = vector.load %arg3[%c0_22, %c0_23] : memref<8x80xf32, #tpu.memory_space<vmem>>, vector<8x80xf32>
    %46 = arith.mulf %44, %44 : vector<80x64xf32>
    %cst_24 = arith.constant dense<0.000000e+00> : vector<8x64xf32>
    %47 = tpu.matmul %45, %46, %cst_24 {dimension_numbers = #tpu.dot_dimension_numbers<[1], [0], [0], [1], [0, 0, 1, 1], [], []>} : vector<8x80xf32>, vector<80x64xf32>, vector<8x64xf32> -> vector<8x64xf32>
    %48 = vector.extract_strided_slice %47 {offsets = [0, 0], sizes = [8, 32], strides = [1, 1]} : vector<8x64xf32> to vector<8x32xf32>
    %cst_25 = arith.constant dense<0.000000e+00> : vector<8xf32>
    %49 = vector.multi_reduction <add>, %48, %cst_25 [1] : vector<8x32xf32> to vector<8xf32>
    %50 = vector.shape_cast %49 : vector<8xf32> to vector<8x1xf32>
    %51 = vector.extract_strided_slice %47 {offsets = [0, 32], sizes = [8, 32], strides = [1, 1]} : vector<8x64xf32> to vector<8x32xf32>
    %cst_26 = arith.constant dense<0.000000e+00> : vector<8xf32>
    %52 = vector.multi_reduction <add>, %51, %cst_26 [1] : vector<8x32xf32> to vector<8xf32>
    %53 = vector.shape_cast %52 : vector<8xf32> to vector<8x1xf32>
    %cst_27 = arith.constant 0.000000e+00 : f32
    %54 = vector.broadcast %cst_27 : f32 to vector<8x1xf32>
    %55 = arith.cmpf ogt, %50, %54 : vector<8x1xf32>
    %cst_28 = arith.constant 1.000000e-30 : f32
    %56 = vector.broadcast %cst_28 : f32 to vector<8x1xf32>
    %57 = arith.maximumf %50, %56 : vector<8x1xf32>
    %58 = math.sqrt %57 : vector<8x1xf32>
    %cst_29 = arith.constant 0.000000e+00 : f32
    %59 = vector.broadcast %cst_29 : f32 to vector<8x1xf32>
    %60 = arith.select %55, %58, %59 : vector<8x1xi1>, vector<8x1xf32>
    %61 = vector.shape_cast %60 : vector<8x1xf32> to vector<1x8x1xf32>
    %cst_30 = arith.constant dense<0.000000e+00> : vector<1xf32>
    %62 = vector.multi_reduction <add>, %61, %cst_30 [1, 2] : vector<1x8x1xf32> to vector<1xf32>
    %63 = vector.shape_cast %62 : vector<1xf32> to vector<1x1x1xf32>
    %64 = vector.extract %63[0, 0, 0] : f32 from vector<1x1x1xf32>
    %cst_31 = arith.constant 0.000000e+00 : f32
    %65 = vector.broadcast %cst_31 : f32 to vector<8x1xf32>
    %66 = arith.cmpf ogt, %53, %65 : vector<8x1xf32>
    %cst_32 = arith.constant 1.000000e-30 : f32
    %67 = vector.broadcast %cst_32 : f32 to vector<8x1xf32>
    %68 = arith.maximumf %53, %67 : vector<8x1xf32>
    %69 = math.sqrt %68 : vector<8x1xf32>
    %cst_33 = arith.constant 0.000000e+00 : f32
    %70 = vector.broadcast %cst_33 : f32 to vector<8x1xf32>
    %71 = arith.select %66, %69, %70 : vector<8x1xi1>, vector<8x1xf32>
    %72 = vector.shape_cast %71 : vector<8x1xf32> to vector<1x8x1xf32>
    %cst_34 = arith.constant dense<0.000000e+00> : vector<1xf32>
    %73 = vector.multi_reduction <add>, %72, %cst_34 [1, 2] : vector<1x8x1xf32> to vector<1xf32>
    %74 = vector.shape_cast %73 : vector<1xf32> to vector<1x1x1xf32>
    %75 = vector.extract %74[0, 0, 0] : f32 from vector<1x1x1xf32>
    %cst_35 = arith.constant 1.000000e+01 : f32
    %76 = arith.mulf %cst_35, %26 : f32
    %77 = arith.addf %76, %43 : f32
    %cst_36 = arith.constant 9.99999974E-5 : f32
    %78 = arith.mulf %cst_36, %64 : f32
    %79 = arith.addf %77, %78 : f32
    %cst_37 = arith.constant 9.99999974E-5 : f32
    %80 = arith.mulf %cst_37, %75 : f32
    %81 = arith.addf %79, %80 : f32
    %c0_38 = arith.constant 0 : index
    %82 = memref.load %arg4[%c0_38] : memref<4xf32, #tpu.memory_space<smem>>
    memref.store %81, %arg4[%c0_38] : memref<4xf32, #tpu.memory_space<smem>>
    %c1 = arith.constant 1 : index
    %83 = memref.load %arg4[%c1] : memref<4xf32, #tpu.memory_space<smem>>
    memref.store %26, %arg4[%c1] : memref<4xf32, #tpu.memory_space<smem>>
    %c2 = arith.constant 2 : index
    %84 = memref.load %arg4[%c2] : memref<4xf32, #tpu.memory_space<smem>>
    memref.store %43, %arg4[%c2] : memref<4xf32, #tpu.memory_space<smem>>
    %c3 = arith.constant 3 : index
    %85 = memref.load %arg4[%c3] : memref<4xf32, #tpu.memory_space<smem>>
    memref.store %42, %arg4[%c3] : memref<4xf32, #tpu.memory_space<smem>>
    return
  }
}

</mosaic_0001>

<llo_original>
// kernel: custom_loss_packed.1
$region0: #{custom_loss_packed.1}
  #allocation0 [shape = 'u32[]', space=smem, size = 0x4, offset = 0x4, fixed_abs, tag = 'smem constant byte address 0x4 - core index']
  #allocation1 [shape = 'u32[144,128]{1,0:T(1,128)}', space=vmem, size = 0x12000, scoped, tag = 'internal scratch']
  %s0 = inlined_call_operand.vmem [shape: f32[272,9], index: 0, kind: input, shape index: {}]
  %s1 = inlined_call_operand.vmem [shape: f32[80,64], index: 1, kind: input, shape index: {}]
  %s2 = inlined_call_operand.vmem [shape: f32[72,2], index: 2, kind: input, shape index: {}]
  %s3 = inlined_call_operand.vmem [shape: f32[8,80], index: 3, kind: input, shape index: {}]
  %s4 = inlined_call_operand.vmem [shape: f32[4], index: 4, kind: output, shape index: {}]
  %s5 = sld [smem:[#allocation0]]
  $region26: #{custom_loss_packed.1} parent=0
    _
  %s7 = ssub.s32 1, %s5
  %s8 = scalar_select 0, %s7, %s5
  $region1: #{custom_loss_packed.1} parent=0
    #allocation2 [shape = 'u8[512]{0}', space=smem, size = 0x200, scoped, tag = 'output window, operand 0, single buffered']
    #allocation3 [shape = 's32[1]{0}', space=sflag, size = 0x4, scoped, tag = 'scoped memory for custom_loss_packed.1']
    %9 = vsyncpa [#allocation3], 0
    // Predicated region
    $region2: #{custom_loss_packed.1} parent=1 // pred_check
      _
    $region3: #{custom_loss_packed.1} parent=1 // pred_check_branch
      %11 = sbr.rel (0) target = $region5
    $region4: #{custom_loss_packed.1} parent=1 // pred_region
      _
    $region5: #{custom_loss_packed.1} parent=1 // pred_fallthru
      _
    // Predicated region
    $region6: #{custom_loss_packed.1} parent=1 // pred_check
      _
    $region7: #{custom_loss_packed.1} parent=1 // pred_check_branch
      %13 = sbr.rel (0) target = $region9
    $region8: #{custom_loss_packed.1} parent=1 // pred_region
      _
    $region9: #{custom_loss_packed.1} parent=1 // pred_fallthru
      _
    // Predicated region
    $region10: #{custom_loss_packed.1} parent=1 // pred_check
      _
    $region11: #{custom_loss_packed.1} parent=1 // pred_check_branch
      %15 = sbr.rel (0) target = $region13
    $region12: #{custom_loss_packed.1} parent=1 // pred_region
      _
    $region13: #{custom_loss_packed.1} parent=1 // pred_fallthru
      _
    // Predicated region
    $region14: #{custom_loss_packed.1} parent=1 // pred_check
      _
    $region15: #{custom_loss_packed.1} parent=1 // pred_check_branch
      %17 = sbr.rel (0) target = $region17
    $region16: #{custom_loss_packed.1} parent=1 // pred_region
      _
    $region17: #{custom_loss_packed.1} parent=1 // pred_fallthru
      _
    %v18 = vld [vmem:[%s0] sm:$0xff]
    %v19 = vld [vmem:[%s0 + $0x8] sm:$0xff]
    %v20 = vld [vmem:[%s0 + $0x10] sm:$0xff]
    %v21 = vld [vmem:[%s0 + $0x18] sm:$0xff]
    %v22 = vld [vmem:[%s0 + $0x20] sm:$0xff]
    %v23 = vld [vmem:[%s0 + $0x28] sm:$0xff]
    %v24 = vld [vmem:[%s0 + $0x30] sm:$0xff]
    %v25 = vld [vmem:[%s0 + $0x38] sm:$0xff]
    %v26 = vld [vmem:[%s0 + $0x40] sm:$0xff]
    %v27 = vld [vmem:[%s0 + $0x48] sm:$0xff]
    %v28 = vld [vmem:[%s0 + $0x50] sm:$0xff]
    %v29 = vld [vmem:[%s0 + $0x58] sm:$0xff]
    %v30 = vld [vmem:[%s0 + $0x60] sm:$0xff]
    %v31 = vld [vmem:[%s0 + $0x68] sm:$0xff]
    %v32 = vld [vmem:[%s0 + $0x70] sm:$0xff]
    %v33 = vld [vmem:[%s0 + $0x78] sm:$0xff]
    %v34 = vld [vmem:[%s0 + $0x80] sm:$0xff]
    %v35 = vld [vmem:[%s0 + $0x88] sm:$0xff]
    %v36 = vld [vmem:[%s0 + $0x90] sm:$0xff]
    %v37 = vld [vmem:[%s0 + $0x98] sm:$0xff]
    %v38 = vld [vmem:[%s0 + $0xa0] sm:$0xff]
    %v39 = vld [vmem:[%s0 + $0xa8] sm:$0xff]
    %v40 = vld [vmem:[%s0 + $0xb0] sm:$0xff]
    %v41 = vld [vmem:[%s0 + $0xb8] sm:$0xff]
    %v42 = vld [vmem:[%s0 + $0xc0] sm:$0xff]
    %v43 = vld [vmem:[%s0 + $0xc8] sm:$0xff]
    %v44 = vld [vmem:[%s0 + $0xd0] sm:$0xff]
    %v45 = vld [vmem:[%s0 + $0xd8] sm:$0xff]
    %v46 = vld [vmem:[%s0 + $0xe0] sm:$0xff]
    %v47 = vld [vmem:[%s0 + $0xe8] sm:$0xff]
    %v48 = vld [vmem:[%s0 + $0xf0] sm:$0xff]
    %v49 = vld [vmem:[%s0 + $0xf8] sm:$0xff]
    %v50 = vld [vmem:[%s0 + $0x100] sm:$0xff]
    %v51 = vld [vmem:[%s0 + $0x108] sm:$0xff]
    %v52 = vld [vmem:[%s1] sm:$0xff]
    %v53 = vld [vmem:[%s1 + $0x8] sm:$0x1]
    %v54 = vlaneseq
    %v55 = vshrl.u32 %v54, 7
    %v56 = vsub.s32 0, %v55
    %v57 = vrot.slane %v53, %v56
    %vm58 = vcmask 64512
    %v60 = vsel %vm58, %v18, 0
    %v63 = vsel %vm58, %v19, 0
    %v66 = vsel %vm58, %v20, 0
    %v69 = vsel %vm58, %v21, 0
    %v72 = vsel %vm58, %v22, 0
    %v75 = vsel %vm58, %v23, 0
    %v78 = vsel %vm58, %v24, 0
    %v81 = vsel %vm58, %v25, 0
    %v84 = vsel %vm58, %v26, 0
    %v87 = vsel %vm58, %v27, 0
    %v90 = vsel %vm58, %v28, 0
    %v93 = vsel %vm58, %v29, 0
    %v96 = vsel %vm58, %v30, 0
    %v99 = vsel %vm58, %v31, 0
    %v102 = vsel %vm58, %v32, 0
    %v105 = vsel %vm58, %v33, 0
    %v108 = vsel %vm58, %v34, 0
    %v111 = vsel %vm58, %v35, 0
    %v114 = vsel %vm58, %v36, 0
    %v117 = vsel %vm58, %v37, 0
    %v120 = vsel %vm58, %v38, 0
    %v123 = vsel %vm58, %v39, 0
    %v126 = vsel %vm58, %v40, 0
    %v129 = vsel %vm58, %v41, 0
    %v132 = vsel %vm58, %v42, 0
    %v135 = vsel %vm58, %v43, 0
    %v138 = vsel %vm58, %v44, 0
    %v141 = vsel %vm58, %v45, 0
    %v144 = vsel %vm58, %v46, 0
    %v147 = vsel %vm58, %v47, 0
    %v150 = vsel %vm58, %v48, 0
    %v153 = vsel %vm58, %v49, 0
    %v156 = vsel %vm58, %v50, 0
    %v159 = vsel %vm58, %v51, 0
    %161 = vmatprep.subr.mxu0 0.0
    %162 = vmatpush1.msra.mxu0 %v52
    %163 = vmatprep.subr.mxu0 0.0
    %164 = vmatpush1.msra.mxu0 0.0
    %165 = vmatprep.subr.mxu0 0.0
    %166 = vmatpush1.msra.mxu0 0.0
    %167 = vmatprep.subr.mxu0 0.0
    %168 = vmatpush1.msra.mxu0 0.0
    %169 = vmatprep.subr.mxu0 0.0
    %170 = vmatpush1.msra.mxu0 0.0
    %171 = vmatprep.subr.mxu0 0.0
    %172 = vmatpush1.msra.mxu0 0.0
    %173 = vmatprep.subr.mxu0 0.0
    %174 = vmatpush1.msra.mxu0 0.0
    %175 = vmatprep.subr.mxu0 0.0
    %176 = vmatpush1.msra.mxu0 0.0
    %177 = vmatprep.subr.mxu0 0.0
    %178 = vmatpush1.msra.mxu0 0.0
    %179 = vmatprep.subr.mxu0 0.0
    %180 = vmatpush1.msra.mxu0 0.0
    %181 = vmatprep.subr.mxu0 0.0
    %182 = vmatpush1.msra.mxu0 0.0
    %183 = vmatprep.subr.mxu0 0.0
    %184 = vmatpush1.msra.mxu0 0.0
    %185 = vmatprep.subr.mxu0 0.0
    %186 = vmatpush1.msra.mxu0 0.0
    %187 = vmatprep.subr.mxu0 0.0
    %188 = vmatpush1.msra.mxu0 0.0
    %189 = vmatprep.subr.mxu0 0.0
    %190 = vmatpush1.msra.mxu0 0.0
    %191 = vmatprep.subr.mxu0 0.0
    %192 = vmatpush1.msra.mxu0 0.0
    %193 = vmatprep.subr.mxu0 0.0
    %194 = vmatpush1.msra.mxu0 0.0
    %195 = vmatprep.subr.mxu0 0.0
    %196 = vmatpush1.msra.mxu0 0.0
    %197 = vmatprep.subr.mxu0 0.0
    %198 = vmatpush1.msra.mxu0 0.0
    %199 = vmatprep.subr.mxu0 0.0
    %200 = vmatpush1.msra.mxu0 0.0
    %201 = vmatprep.subr.mxu0 0.0
    %202 = vmatpush1.msra.mxu0 0.0
    %203 = vmatprep.subr.mxu0 0.0
    %204 = vmatpush1.msra.mxu0 0.0
    %205 = vmatprep.subr.mxu0 0.0
    %206 = vmatpush1.msra.mxu0 0.0
    %207 = vmatprep.subr.mxu0 0.0
    %208 = vmatpush1.msra.mxu0 0.0
    %209 = vmatprep.subr.mxu0 0.0
    %210 = vmatpush1.msra.mxu0 0.0
    %211 = vmatprep.subr.mxu0 0.0
    %212 = vmatpush1.msra.mxu0 0.0
    %213 = vmatprep.subr.mxu0 0.0
    %214 = vmatpush1.msra.mxu0 0.0
    %215 = vmatprep.subr.mxu0 0.0
    %216 = vmatpush1.msra.mxu0 0.0
    %217 = vmatprep.subr.mxu0 0.0
    %218 = vmatpush1.msra.mxu0 0.0
    %219 = vmatprep.subr.mxu0 0.0
    %220 = vmatpush1.msra.mxu0 0.0
    %221 = vmatprep.subr.mxu0 0.0
    %222 = vmatpush1.msra.mxu0 0.0
    %223 = vmatprep.subr.mxu0 0.0
    %224 = vmatpush1.msra.mxu0 0.0
    %225 = vmatprep.mubr.f32.mxu0 0.0
    %226 = vmatmul.mubr.f32.gmra.mrb[0].mxu0 %v60
    %v227 = vpop.f32.mrb[0].mxu0
    %v228 = vadd.f32 %v57, %v227
    %v229 = vpop.f32.mrb[0].mxu0
    %230 = vmatprep.mubr.f32.mxu0 0.0
    %231 = vmatmul.mubr.f32.gmra.mrb[0].mxu0 %v63
    %v232 = vpop.f32.mrb[0].mxu0
    %v233 = vadd.f32 %v57, %v232
    %v234 = vpop.f32.mrb[0].mxu0
    %235 = vmatprep.mubr.f32.mxu0 0.0
    %236 = vmatmul.mubr.f32.gmra.mrb[0].mxu0 %v66
    %v237 = vpop.f32.mrb[0].mxu0
    %v238 = vadd.f32 %v57, %v237
    %v239 = vpop.f32.mrb[0].mxu0
    %240 = vmatprep.mubr.f32.mxu0 0.0
    %241 = vmatmul.mubr.f32.gmra.mrb[0].mxu0 %v69
    %v242 = vpop.f32.mrb[0].mxu0
    %v243 = vadd.f32 %v57, %v242
    %v244 = vpop.f32.mrb[0].mxu0
    %245 = vmatprep.mubr.f32.mxu0 0.0
    %246 = vmatmul.mubr.f32.gmra.mrb[0].mxu0 %v72
    %v247 = vpop.f32.mrb[0].mxu0
    %v248 = vadd.f32 %v57, %v247
    %v249 = vpop.f32.mrb[0].mxu0
    %250 = vmatprep.mubr.f32.mxu0 0.0
    %251 = vmatmul.mubr.f32.gmra.mrb[0].mxu0 %v75
    %v252 = vpop.f32.mrb[0].mxu0
    %v253 = vadd.f32 %v57, %v252
    %v254 = vpop.f32.mrb[0].mxu0
    %255 = vmatprep.mubr.f32.mxu0 0.0
    %256 = vmatmul.mubr.f32.gmra.mrb[0].mxu0 %v78
    %v257 = vpop.f32.mrb[0].mxu0
    %v258 = vadd.f32 %v57, %v257
    %v259 = vpop.f32.mrb[0].mxu0
    %260 = vmatprep.mubr.f32.mxu0 0.0
    %261 = vmatmul.mubr.f32.gmra.mrb[0].mxu0 %v81
    %v262 = vpop.f32.mrb[0].mxu0
    %v263 = vadd.f32 %v57, %v262
    %v264 = vpop.f32.mrb[0].mxu0
    %265 = vmatprep.mubr.f32.mxu0 0.0
    %266 = vmatmul.mubr.f32.gmra.mrb[0].mxu0 %v84
    %v267 = vpop.f32.mrb[0].mxu0
    %v268 = vadd.f32 %v57, %v267
    %v269 = vpop.f32.mrb[0].mxu0
    %270 = vmatprep.mubr.f32.mxu0 0.0
    %271 = vmatmul.mubr.f32.gmra.mrb[0].mxu0 %v87
    %v272 = vpop.f32.mrb[0].mxu0
    %v273 = vadd.f32 %v57, %v272
    %v274 = vpop.f32.mrb[0].mxu0
    %275 = vmatprep.mubr.f32.mxu0 0.0
    %276 = vmatmul.mubr.f32.gmra.mrb[0].mxu0 %v90
    %v277 = vpop.f32.mrb[0].mxu0
    %v278 = vadd.f32 %v57, %v277
    %v279 = vpop.f32.mrb[0].mxu0
    %280 = vmatprep.mubr.f32.mxu0 0.0
    %281 = vmatmul.mubr.f32.gmra.mrb[0].mxu0 %v93
    %v282 = vpop.f32.mrb[0].mxu0
    %v283 = vadd.f32 %v57, %v282
    %v284 = vpop.f32.mrb[0].mxu0
    %285 = vmatprep.mubr.f32.mxu0 0.0
    %286 = vmatmul.mubr.f32.gmra.mrb[0].mxu0 %v96
    %v287 = vpop.f32.mrb[0].mxu0
    %v288 = vadd.f32 %v57, %v287
    %v289 = vpop.f32.mrb[0].mxu0
    %290 = vmatprep.mubr.f32.mxu0 0.0
    %291 = vmatmul.mubr.f32.gmra.mrb[0].mxu0 %v99
    %v292 = vpop.f32.mrb[0].mxu0
    %v293 = vadd.f32 %v57, %v292
    %v294 = vpop.f32.mrb[0].mxu0
    %295 = vmatprep.mubr.f32.mxu0 0.0
    %296 = vmatmul.mubr.f32.gmra.mrb[0].mxu0 %v102
    %v297 = vpop.f32.mrb[0].mxu0
    %v298 = vadd.f32 %v57, %v297
    %v299 = vpop.f32.mrb[0].mxu0
    %300 = vmatprep.mubr.f32.mxu0 0.0
    %301 = vmatmul.mubr.f32.gmra.mrb[0].mxu0 %v105
    %v302 = vpop.f32.mrb[0].mxu0
    %v303 = vadd.f32 %v57, %v302
    %v304 = vpop.f32.mrb[0].mxu0
    %305 = vmatprep.mubr.f32.mxu0 0.0
    %306 = vmatmul.mubr.f32.gmra.mrb[0].mxu0 %v108
    %v307 = vpop.f32.mrb[0].mxu0
    %v308 = vadd.f32 %v57, %v307
    %v309 = vpop.f32.mrb[0].mxu0
    %310 = vmatprep.mubr.f32.mxu0 0.0
    %311 = vmatmul.mubr.f32.gmra.mrb[0].mxu0 %v111
    %v312 = vpop.f32.mrb[0].mxu0
    %v313 = vadd.f32 %v57, %v312
    %v314 = vpop.f32.mrb[0].mxu0
    %315 = vmatprep.mubr.f32.mxu0 0.0
    %316 = vmatmul.mubr.f32.gmra.mrb[0].mxu0 %v114
    %v317 = vpop.f32.mrb[0].mxu0
    %v318 = vadd.f32 %v57, %v317
    %v319 = vpop.f32.mrb[0].mxu0
    %320 = vmatprep.mubr.f32.mxu0 0.0
    %321 = vmatmul.mubr.f32.gmra.mrb[0].mxu0 %v117
    %v322 = vpop.f32.mrb[0].mxu0
    %v323 = vadd.f32 %v57, %v322
    %v324 = vpop.f32.mrb[0].mxu0
    %325 = vmatprep.mubr.f32.mxu0 0.0
    %326 = vmatmul.mubr.f32.gmra.mrb[0].mxu0 %v120
    %v327 = vpop.f32.mrb[0].mxu0
    %v328 = vadd.f32 %v57, %v327
    %v329 = vpop.f32.mrb[0].mxu0
    %330 = vmatprep.mubr.f32.mxu0 0.0
    %331 = vmatmul.mubr.f32.gmra.mrb[0].mxu0 %v123
    %v332 = vpop.f32.mrb[0].mxu0
    %v333 = vadd.f32 %v57, %v332
    %v334 = vpop.f32.mrb[0].mxu0
    %335 = vmatprep.mubr.f32.mxu0 0.0
    %336 = vmatmul.mubr.f32.gmra.mrb[0].mxu0 %v126
    %v337 = vpop.f32.mrb[0].mxu0
    %v338 = vadd.f32 %v57, %v337
    %v339 = vpop.f32.mrb[0].mxu0
    %340 = vmatprep.mubr.f32.mxu0 0.0
    %341 = vmatmul.mubr.f32.gmra.mrb[0].mxu0 %v129
    %v342 = vpop.f32.mrb[0].mxu0
    %v343 = vadd.f32 %v57, %v342
    %v344 = vpop.f32.mrb[0].mxu0
    %345 = vmatprep.mubr.f32.mxu0 0.0
    %346 = vmatmul.mubr.f32.gmra.mrb[0].mxu0 %v132
    %v347 = vpop.f32.mrb[0].mxu0
    %v348 = vadd.f32 %v57, %v347
    %v349 = vpop.f32.mrb[0].mxu0
    %350 = vmatprep.mubr.f32.mxu0 0.0
    %351 = vmatmul.mubr.f32.gmra.mrb[0].mxu0 %v135
    %v352 = vpop.f32.mrb[0].mxu0
    %v353 = vadd.f32 %v57, %v352
    %v354 = vpop.f32.mrb[0].mxu0
    %355 = vmatprep.mubr.f32.mxu0 0.0
    %356 = vmatmul.mubr.f32.gmra.mrb[0].mxu0 %v138
    %v357 = vpop.f32.mrb[0].mxu0
    %v358 = vadd.f32 %v57, %v357
    %v359 = vpop.f32.mrb[0].mxu0
    %360 = vmatprep.mubr.f32.mxu0 0.0
    %361 = vmatmul.mubr.f32.gmra.mrb[0].mxu0 %v141
    %v362 = vpop.f32.mrb[0].mxu0
    %v363 = vadd.f32 %v57, %v362
    %v364 = vpop.f32.mrb[0].mxu0
    %365 = vmatprep.mubr.f32.mxu0 0.0
    %366 = vmatmul.mubr.f32.gmra.mrb[0].mxu0 %v144
    %v367 = vpop.f32.mrb[0].mxu0
    %v368 = vadd.f32 %v57, %v367
    %v369 = vpop.f32.mrb[0].mxu0
    %370 = vmatprep.mubr.f32.mxu0 0.0
    %371 = vmatmul.mubr.f32.gmra.mrb[0].mxu0 %v147
    %v372 = vpop.f32.mrb[0].mxu0
    %v373 = vadd.f32 %v57, %v372
    %v374 = vpop.f32.mrb[0].mxu0
    %375 = vmatprep.mubr.f32.mxu0 0.0
    %376 = vmatmul.mubr.f32.gmra.mrb[0].mxu0 %v150
    %v377 = vpop.f32.mrb[0].mxu0
    %v378 = vadd.f32 %v57, %v377
    %v379 = vpop.f32.mrb[0].mxu0
    %380 = vmatprep.mubr.f32.mxu0 0.0
    %381 = vmatmul.mubr.f32.gmra.mrb[0].mxu0 %v153
    %v382 = vpop.f32.mrb[0].mxu0
    %v383 = vadd.f32 %v57, %v382
    %v384 = vpop.f32.mrb[0].mxu0
    %385 = vmatprep.mubr.f32.mxu0 0.0
    %386 = vmatmul.mubr.f32.gmra.mrb[0].mxu0 %v156
    %v387 = vpop.f32.mrb[0].mxu0
    %v388 = vadd.f32 %v57, %v387
    %v389 = vpop.f32.mrb[0].mxu0
    %390 = vmatprep.mubr.f32.mxu0 0.0
    %391 = vmatmul.mubr.f32.gmra.mrb[0].mxu0 %v159
    %v392 = vpop.f32.mrb[0].mxu0
    %v393 = vadd.f32 %v57, %v392
    %v394 = vpop.f32.mrb[0].mxu0
    %395 = vdwg.mxu0
    %v396 = vtanh.pop %v228
    %v397 = vtanh.pop %v233
    %v398 = vtanh.pop %v238
    %v399 = vtanh.pop %v243
    %v400 = vtanh.pop %v248
    %v401 = vtanh.pop %v253
    %v402 = vtanh.pop %v258
    %v403 = vtanh.pop %v263
    %v404 = vtanh.pop %v268
    %v405 = vtanh.pop %v273
    %v406 = vtanh.pop %v278
    %v407 = vtanh.pop %v283
    %v408 = vtanh.pop %v288
    %v409 = vtanh.pop %v293
    %v410 = vtanh.pop %v298
    %v411 = vtanh.pop %v303
    %v412 = vtanh.pop %v308
    %v413 = vtanh.pop %v313
    %v414 = vtanh.pop %v318
    %v415 = vtanh.pop %v323
    %v416 = vtanh.pop %v328
    %v417 = vtanh.pop %v333
    %v418 = vtanh.pop %v338
    %v419 = vtanh.pop %v343
    %v420 = vtanh.pop %v348
    %v421 = vtanh.pop %v353
    %v422 = vtanh.pop %v358
    %v423 = vtanh.pop %v363
    %v424 = vtanh.pop %v368
    %v425 = vtanh.pop %v373
    %v426 = vtanh.pop %v378
    %v427 = vtanh.pop %v383
    %v428 = vtanh.pop %v388
    %v429 = vtanh.pop %v393
    %v430 = vld [vmem:[%s1 + $0x10] sm:$0xff]
    %v431 = vld [vmem:[%s1 + $0x18] sm:$0xff]
    %v432 = vld [vmem:[%s1 + $0x20] sm:$0xff]
    %v433 = vld [vmem:[%s1 + $0x28] sm:$0xff]
    %v434 = vld [vmem:[%s1 + $0x30] sm:$0xff]
    %v435 = vld [vmem:[%s1 + $0x38] sm:$0xff]
    %v436 = vld [vmem:[%s1 + $0x40] sm:$0xff]
    %v437 = vld [vmem:[%s1 + $0x48] sm:$0xff]
    %v438 = vld [vmem:[%s1 + $0x9] sm:$0x1]
    %v439 = vlaneseq
    %v440 = vshrl.u32 %v439, 7
    %v441 = vsub.s32 0, %v440
    %v442 = vrot.slane %v438, %v441
    %vm443 = vcmask 523264
    %v445 = vsel %vm443, %v396, 0
    %v448 = vsel %vm443, %v397, 0
    %v451 = vsel %vm443, %v398, 0
    %v454 = vsel %vm443, %v399, 0
    %v457 = vsel %vm443, %v400, 0
    %v460 = vsel %vm443, %v401, 0
    %v463 = vsel %vm443, %v402, 0
    %v466 = vsel %vm443, %v403, 0
    %v469 = vsel %vm443, %v404, 0
    %v472 = vsel %vm443, %v405, 0
    %v475 = vsel %vm443, %v406, 0
    %v478 = vsel %vm443, %v407, 0
    %v481 = vsel %vm443, %v408, 0
    %v484 = vsel %vm443, %v409, 0
    %v487 = vsel %vm443, %v410, 0
    %v490 = vsel %vm443, %v411, 0
    %v493 = vsel %vm443, %v412, 0
    %v496 = vsel %vm443, %v413, 0
    %v499 = vsel %vm443, %v414, 0
    %v502 = vsel %vm443, %v415, 0
    %v505 = vsel %vm443, %v416, 0
    %v508 = vsel %vm443, %v417, 0
    %v511 = vsel %vm443, %v418, 0
    %v514 = vsel %vm443, %v419, 0
    %v517 = vsel %vm443, %v420, 0
    %v520 = vsel %vm443, %v421, 0
    %v523 = vsel %vm443, %v422, 0
    %v526 = vsel %vm443, %v423, 0
    %v529 = vsel %vm443, %v424, 0
    %v532 = vsel %vm443, %v425, 0
    %v535 = vsel %vm443, %v426, 0
    %v538 = vsel %vm443, %v427, 0
    %v541 = vsel %vm443, %v428, 0
    %v544 = vsel %vm443, %v429, 0
    %546 = vmatprep.subr.mxu0 0.0
    %547 = vmatpush1.msra.mxu0 %v430
    %548 = vmatprep.subr.mxu0 0.0
    %549 = vmatpush1.msra.mxu0 %v431
    %550 = vmatprep.subr.mxu0 0.0
    %551 = vmatpush1.msra.mxu0 %v432
    %552 = vmatprep.subr.mxu0 0.0
    %553 = vmatpush1.msra.mxu0 %v433
    %554 = vmatprep.subr.mxu0 0.0
    %555 = vmatpush1.msra.mxu0 %v434
    %556 = vmatprep.subr.mxu0 0.0
    %557 = vmatpush1.msra.mxu0 %v435
    %558 = vmatprep.subr.mxu0 0.0
    %559 = vmatpush1.msra.mxu0 %v436
    %560 = vmatprep.subr.mxu0 0.0
    %561 = vmatpush1.msra.mxu0 %v437
    %562 = vmatprep.subr.mxu0 0.0
    %563 = vmatpush1.msra.mxu0 0.0
    %564 = vmatprep.subr.mxu0 0.0
    %565 = vmatpush1.msra.mxu0 0.0
    %566 = vmatprep.subr.mxu0 0.0
    %567 = vmatpush1.msra.mxu0 0.0
    %568 = vmatprep.subr.mxu0 0.0
    %569 = vmatpush1.msra.mxu0 0.0
    %570 = vmatprep.subr.mxu0 0.0
    %571 = vmatpush1.msra.mxu0 0.0
    %572 = vmatprep.subr.mxu0 0.0
    %573 = vmatpush1.msra.mxu0 0.0
    %574 = vmatprep.subr.mxu0 0.0
    %575 = vmatpush1.msra.mxu0 0.0
    %576 = vmatprep.subr.mxu0 0.0
    %577 = vmatpush1.msra.mxu0 0.0
    %578 = vmatprep.subr.mxu0 0.0
    %579 = vmatpush1.msra.mxu0 0.0
    %580 = vmatprep.subr.mxu0 0.0
    %581 = vmatpush1.msra.mxu0 0.0
    %582 = vmatprep.subr.mxu0 0.0
    %583 = vmatpush1.msra.mxu0 0.0
    %584 = vmatprep.subr.mxu0 0.0
    %585 = vmatpush1.msra.mxu0 0.0
    %586 = vmatprep.subr.mxu0 0.0
    %587 = vmatpush1.msra.mxu0 0.0
    %588 = vmatprep.subr.mxu0 0.0
    %589 = vmatpush1.msra.mxu0 0.0
    %590 = vmatprep.subr.mxu0 0.0
    %591 = vmatpush1.msra.mxu0 0.0
    %592 = vmatprep.subr.mxu0 0.0
    %593 = vmatpush1.msra.mxu0 0.0
    %594 = vmatprep.subr.mxu0 0.0
    %595 = vmatpush1.msra.mxu0 0.0
    %596 = vmatprep.subr.mxu0 0.0
    %597 = vmatpush1.msra.mxu0 0.0
    %598 = vmatprep.subr.mxu0 0.0
    %599 = vmatpush1.msra.mxu0 0.0
    %600 = vmatprep.subr.mxu0 0.0
    %601 = vmatpush1.msra.mxu0 0.0
    %602 = vmatprep.subr.mxu0 0.0
    %603 = vmatpush1.msra.mxu0 0.0
    %604 = vmatprep.subr.mxu0 0.0
    %605 = vmatpush1.msra.mxu0 0.0
    %606 = vmatprep.subr.mxu0 0.0
    %607 = vmatpush1.msra.mxu0 0.0
    %608 = vmatprep.subr.mxu0 0.0
    %609 = vmatpush1.msra.mxu0 0.0
    %610 = vmatprep.mubr.f32.mxu0 0.0
    %611 = vmatmul.mubr.f32.gmra.mrb[0].mxu0 %v445
    %v612 = vpop.f32.mrb[0].mxu0
    %v613 = vadd.f32 %v442, %v612
    %v614 = vpop.f32.mrb[0].mxu0
    %615 = vmatprep.mubr.f32.mxu0 0.0
    %616 = vmatmul.mubr.f32.gmra.mrb[0].mxu0 %v448
    %v617 = vpop.f32.mrb[0].mxu0
    %v618 = vadd.f32 %v442, %v617
    %v619 = vpop.f32.mrb[0].mxu0
    %620 = vmatprep.mubr.f32.mxu0 0.0
    %621 = vmatmul.mubr.f32.gmra.mrb[0].mxu0 %v451
    %v622 = vpop.f32.mrb[0].mxu0
    %v623 = vadd.f32 %v442, %v622
    %v624 = vpop.f32.mrb[0].mxu0
    %625 = vmatprep.mubr.f32.mxu0 0.0
    %626 = vmatmul.mubr.f32.gmra.mrb[0].mxu0 %v454
    %v627 = vpop.f32.mrb[0].mxu0
    %v628 = vadd.f32 %v442, %v627
    %v629 = vpop.f32.mrb[0].mxu0
    %630 = vmatprep.mubr.f32.mxu0 0.0
    %631 = vmatmul.mubr.f32.gmra.mrb[0].mxu0 %v457
    %v632 = vpop.f32.mrb[0].mxu0
    %v633 = vadd.f32 %v442, %v632
    %v634 = vpop.f32.mrb[0].mxu0
    %635 = vmatprep.mubr.f32.mxu0 0.0
    %636 = vmatmul.mubr.f32.gmra.mrb[0].mxu0 %v460
    %v637 = vpop.f32.mrb[0].mxu0
    %v638 = vadd.f32 %v442, %v637
    %v639 = vpop.f32.mrb[0].mxu0
    %640 = vmatprep.mubr.f32.mxu0 0.0
    %641 = vmatmul.mubr.f32.gmra.mrb[0].mxu0 %v463
    %v642 = vpop.f32.mrb[0].mxu0
    %v643 = vadd.f32 %v442, %v642
    %v644 = vpop.f32.mrb[0].mxu0
    %645 = vmatprep.mubr.f32.mxu0 0.0
    %646 = vmatmul.mubr.f32.gmra.mrb[0].mxu0 %v466
    %v647 = vpop.f32.mrb[0].mxu0
    %v648 = vadd.f32 %v442, %v647
    %v649 = vpop.f32.mrb[0].mxu0
    %650 = vmatprep.mubr.f32.mxu0 0.0
    %651 = vmatmul.mubr.f32.gmra.mrb[0].mxu0 %v469
    %v652 = vpop.f32.mrb[0].mxu0
    %v653 = vadd.f32 %v442, %v652
    %v654 = vpop.f32.mrb[0].mxu0
    %655 = vmatprep.mubr.f32.mxu0 0.0
    %656 = vmatmul.mubr.f32.gmra.mrb[0].mxu0 %v472
    %v657 = vpop.f32.mrb[0].mxu0
    %v658 = vadd.f32 %v442, %v657
    %v659 = vpop.f32.mrb[0].mxu0
    %660 = vmatprep.mubr.f32.mxu0 0.0
    %661 = vmatmul.mubr.f32.gmra.mrb[0].mxu0 %v475
    %v662 = vpop.f32.mrb[0].mxu0
    %v663 = vadd.f32 %v442, %v662
    %v664 = vpop.f32.mrb[0].mxu0
    %665 = vmatprep.mubr.f32.mxu0 0.0
    %666 = vmatmul.mubr.f32.gmra.mrb[0].mxu0 %v478
    %v667 = vpop.f32.mrb[0].mxu0
    %v668 = vadd.f32 %v442, %v667
    %v669 = vpop.f32.mrb[0].mxu0
    %670 = vmatprep.mubr.f32.mxu0 0.0
    %671 = vmatmul.mubr.f32.gmra.mrb[0].mxu0 %v481
    %v672 = vpop.f32.mrb[0].mxu0
    %v673 = vadd.f32 %v442, %v672
    %v674 = vpop.f32.mrb[0].mxu0
    %675 = vmatprep.mubr.f32.mxu0 0.0
    %676 = vmatmul.mubr.f32.gmra.mrb[0].mxu0 %v484
    %v677 = vpop.f32.mrb[0].mxu0
    %v678 = vadd.f32 %v442, %v677
    %v679 = vpop.f32.mrb[0].mxu0
    %680 = vmatprep.mubr.f32.mxu0 0.0
    %681 = vmatmul.mubr.f32.gmra.mrb[0].mxu0 %v487
    %v682 = vpop.f32.mrb[0].mxu0
    %v683 = vadd.f32 %v442, %v682
    %v684 = vpop.f32.mrb[0].mxu0
    %685 = vmatprep.mubr.f32.mxu0 0.0
    %686 = vmatmul.mubr.f32.gmra.mrb[0].mxu0 %v490
    %v687 = vpop.f32.mrb[0].mxu0
    %v688 = vadd.f32 %v442, %v687
    %v689 = vpop.f32.mrb[0].mxu0
    %690 = vmatprep.mubr.f32.mxu0 0.0
    %691 = vmatmul.mubr.f32.gmra.mrb[0].mxu0 %v493
    %v692 = vpop.f32.mrb[0].mxu0
    %v693 = vadd.f32 %v442, %v692
    %v694 = vpop.f32.mrb[0].mxu0
    %695 = vmatprep.mubr.f32.mxu0 0.0
    %696 = vmatmul.mubr.f32.gmra.mrb[0].mxu0 %v496
    %v697 = vpop.f32.mrb[0].mxu0
    %v698 = vadd.f32 %v442, %v697
    %v699 = vpop.f32.mrb[0].mxu0
    %700 = vmatprep.mubr.f32.mxu0 0.0
    %701 = vmatmul.mubr.f32.gmra.mrb[0].mxu0 %v499
    %v702 = vpop.f32.mrb[0].mxu0
    %v703 = vadd.f32 %v442, %v702
    %v704 = vpop.f32.mrb[0].mxu0
    %705 = vmatprep.mubr.f32.mxu0 0.0
    %706 = vmatmul.mubr.f32.gmra.mrb[0].mxu0 %v502
    %v707 = vpop.f32.mrb[0].mxu0
    %v708 = vadd.f32 %v442, %v707
    %v709 = vpop.f32.mrb[0].mxu0
    %710 = vmatprep.mubr.f32.mxu0 0.0
    %711 = vmatmul.mubr.f32.gmra.mrb[0].mxu0 %v505
    %v712 = vpop.f32.mrb[0].mxu0
    %v713 = vadd.f32 %v442, %v712
    %v714 = vpop.f32.mrb[0].mxu0
    %715 = vmatprep.mubr.f32.mxu0 0.0
    %716 = vmatmul.mubr.f32.gmra.mrb[0].mxu0 %v508
    %v717 = vpop.f32.mrb[0].mxu0
    %v718 = vadd.f32 %v442, %v717
    %v719 = vpop.f32.mrb[0].mxu0
    %720 = vmatprep.mubr.f32.mxu0 0.0
    %721 = vmatmul.mubr.f32.gmra.mrb[0].mxu0 %v511
    %v722 = vpop.f32.mrb[0].mxu0
    %v723 = vadd.f32 %v442, %v722
    %v724 = vpop.f32.mrb[0].mxu0
    %725 = vmatprep.mubr.f32.mxu0 0.0
    %726 = vmatmul.mubr.f32.gmra.mrb[0].mxu0 %v514
    %v727 = vpop.f32.mrb[0].mxu0
    %v728 = vadd.f32 %v442, %v727
    %v729 = vpop.f32.mrb[0].mxu0
    %730 = vmatprep.mubr.f32.mxu0 0.0
    %731 = vmatmul.mubr.f32.gmra.mrb[0].mxu0 %v517
    %v732 = vpop.f32.mrb[0].mxu0
    %v733 = vadd.f32 %v442, %v732
    %v734 = vpop.f32.mrb[0].mxu0
    %735 = vmatprep.mubr.f32.mxu0 0.0
    %736 = vmatmul.mubr.f32.gmra.mrb[0].mxu0 %v520
    %v737 = vpop.f32.mrb[0].mxu0
    %v738 = vadd.f32 %v442, %v737
    %v739 = vpop.f32.mrb[0].mxu0
    %740 = vmatprep.mubr.f32.mxu0 0.0
    %741 = vmatmul.mubr.f32.gmra.mrb[0].mxu0 %v523
    %v742 = vpop.f32.mrb[0].mxu0
    %v743 = vadd.f32 %v442, %v742
    %v744 = vpop.f32.mrb[0].mxu0
    %745 = vmatprep.mubr.f32.mxu0 0.0
    %746 = vmatmul.mubr.f32.gmra.mrb[0].mxu0 %v526
    %v747 = vpop.f32.mrb[0].mxu0
    %v748 = vadd.f32 %v442, %v747
    %v749 = vpop.f32.mrb[0].mxu0
    %750 = vmatprep.mubr.f32.mxu0 0.0
    %751 = vmatmul.mubr.f32.gmra.mrb[0].mxu0 %v529
    %v752 = vpop.f32.mrb[0].mxu0
    %v753 = vadd.f32 %v442, %v752
    %v754 = vpop.f32.mrb[0].mxu0
    %755 = vmatprep.mubr.f32.mxu0 0.0
    %756 = vmatmul.mubr.f32.gmra.mrb[0].mxu0 %v532
    %v757 = vpop.f32.mrb[0].mxu0
    %v758 = vadd.f32 %v442, %v757
    %v759 = vpop.f32.mrb[0].mxu0
    %760 = vmatprep.mubr.f32.mxu0 0.0
    %761 = vmatmul.mubr.f32.gmra.mrb[0].mxu0 %v535
    %v762 = vpop.f32.mrb[0].mxu0
    %v763 = vadd.f32 %v442, %v762
    %v764 = vpop.f32.mrb[0].mxu0
    %765 = vmatprep.mubr.f32.mxu0 0.0
    %766 = vmatmul.mubr.f32.gmra.mrb[0].mxu0 %v538
    %v767 = vpop.f32.mrb[0].mxu0
    %v768 = vadd.f32 %v442, %v767
    %v769 = vpop.f32.mrb[0].mxu0
    %770 = vmatprep.mubr.f32.mxu0 0.0
    %771 = vmatmul.mubr.f32.gmra.mrb[0].mxu0 %v541
    %v772 = vpop.f32.mrb[0].mxu0
    %v773 = vadd.f32 %v442, %v772
    %v774 = vpop.f32.mrb[0].mxu0
    %775 = vmatprep.mubr.f32.mxu0 0.0
    %776 = vmatmul.mubr.f32.gmra.mrb[0].mxu0 %v544
    %v777 = vpop.f32.mrb[0].mxu0
    %v778 = vadd.f32 %v442, %v777
    %v779 = vpop.f32.mrb[0].mxu0
    %780 = vdwg.mxu0
    %v781 = vtanh.pop %v613
    %v782 = vtanh.pop %v618
    %v783 = vtanh.pop %v623
    %v784 = vtanh.pop %v628
    %v785 = vtanh.pop %v633
    %v786 = vtanh.pop %v638
    %v787 = vtanh.pop %v643
    %v788 = vtanh.pop %v648
    %v789 = vtanh.pop %v653
    %v790 = vtanh.pop %v658
    %v791 = vtanh.pop %v663
    %v792 = vtanh.pop %v668
    %v793 = vtanh.pop %v673
    %v794 = vtanh.pop %v678
    %v795 = vtanh.pop %v683
    %v796 = vtanh.pop %v688
    %v797 = vtanh.pop %v693
    %v798 = vtanh.pop %v698
    %v799 = vtanh.pop %v703
    %v800 = vtanh.pop %v708
    %v801 = vtanh.pop %v713
    %v802 = vtanh.pop %v718
    %v803 = vtanh.pop %v723
    %v804 = vtanh.pop %v728
    %v805 = vtanh.pop %v733
    %v806 = vtanh.pop %v738
    %v807 = vtanh.pop %v743
    %v808 = vtanh.pop %v748
    %v809 = vtanh.pop %v753
    %v810 = vtanh.pop %v758
    %v811 = vtanh.pop %v763
    %v812 = vtanh.pop %v768
    %v813 = vtanh.pop %v773
    %v814 = vtanh.pop %v778
    %v815 = vld [vmem:[%s2] sm:$0xff]
    %v816 = vld [vmem:[%s2 + $0x8] sm:$0xff]
    %v817 = vld [vmem:[%s2 + $0x10] sm:$0xff]
    %v818 = vld [vmem:[%s2 + $0x18] sm:$0xff]
    %v819 = vld [vmem:[%s2 + $0x20] sm:$0xff]
    %v820 = vld [vmem:[%s2 + $0x28] sm:$0xff]
    %v821 = vld [vmem:[%s2 + $0x30] sm:$0xff]
    %v822 = vld [vmem:[%s2 + $0x38] sm:$0xff]
    %v823 = vld [vmem:[%s2 + $0x40] sm:$0x1]
    %v824 = vlaneseq
    %v825 = vshrl.u32 %v824, 7
    %v826 = vsub.s32 0, %v825
    %v827 = vrot.slane %v823, %v826
    %v829 = vsel %vm443, %v781, 0
    %v832 = vsel %vm443, %v782, 0
    %v835 = vsel %vm443, %v783, 0
    %v838 = vsel %vm443, %v784, 0
    %v841 = vsel %vm443, %v785, 0
    %v844 = vsel %vm443, %v786, 0
    %v847 = vsel %vm443, %v787, 0
    %v850 = vsel %vm443, %v788, 0
    %v853 = vsel %vm443, %v789, 0
    %v856 = vsel %vm443, %v790, 0
    %v859 = vsel %vm443, %v791, 0
    %v862 = vsel %vm443, %v792, 0
    %v865 = vsel %vm443, %v793, 0
    %v868 = vsel %vm443, %v794, 0
    %v871 = vsel %vm443, %v795, 0
    %v874 = vsel %vm443, %v796, 0
    %v877 = vsel %vm443, %v797, 0
    %v880 = vsel %vm443, %v798, 0
    %v883 = vsel %vm443, %v799, 0
    %v886 = vsel %vm443, %v800, 0
    %v889 = vsel %vm443, %v801, 0
    %v892 = vsel %vm443, %v802, 0
    %v895 = vsel %vm443, %v803, 0
    %v898 = vsel %vm443, %v804, 0
    %v901 = vsel %vm443, %v805, 0
    %v904 = vsel %vm443, %v806, 0
    %v907 = vsel %vm443, %v807, 0
    %v910 = vsel %vm443, %v808, 0
    %v913 = vsel %vm443, %v809, 0
    %v916 = vsel %vm443, %v810, 0
    %v919 = vsel %vm443, %v811, 0
    %v922 = vsel %vm443, %v812, 0
    %v925 = vsel %vm443, %v813, 0
    %v928 = vsel %vm443, %v814, 0
    %930 = vmatprep.subr.mxu0 0.0
    %931 = vmatpush1.msra.mxu0 %v815
    %932 = vmatprep.subr.mxu0 0.0
    %933 = vmatpush1.msra.mxu0 %v816
    %934 = vmatprep.subr.mxu0 0.0
    %935 = vmatpush1.msra.mxu0 %v817
    %936 = vmatprep.subr.mxu0 0.0
    %937 = vmatpush1.msra.mxu0 %v818
    %938 = vmatprep.subr.mxu0 0.0
    %939 = vmatpush1.msra.mxu0 %v819
    %940 = vmatprep.subr.mxu0 0.0
    %941 = vmatpush1.msra.mxu0 %v820
    %942 = vmatprep.subr.mxu0 0.0
    %943 = vmatpush1.msra.mxu0 %v821
    %944 = vmatprep.subr.mxu0 0.0
    %945 = vmatpush1.msra.mxu0 %v822
    %946 = vmatprep.subr.mxu0 0.0
    %947 = vmatpush1.msra.mxu0 0.0
    %948 = vmatprep.subr.mxu0 0.0
    %949 = vmatpush1.msra.mxu0 0.0
    %950 = vmatprep.subr.mxu0 0.0
    %951 = vmatpush1.msra.mxu0 0.0
    %952 = vmatprep.subr.mxu0 0.0
    %953 = vmatpush1.msra.mxu0 0.0
    %954 = vmatprep.subr.mxu0 0.0
    %955 = vmatpush1.msra.mxu0 0.0
    %956 = vmatprep.subr.mxu0 0.0
    %957 = vmatpush1.msra.mxu0 0.0
    %958 = vmatprep.subr.mxu0 0.0
    %959 = vmatpush1.msra.mxu0 0.0
    %960 = vmatprep.subr.mxu0 0.0
    %961 = vmatpush1.msra.mxu0 0.0
    %962 = vmatprep.subr.mxu0 0.0
    %963 = vmatpush1.msra.mxu0 0.0
    %964 = vmatprep.subr.mxu0 0.0
    %965 = vmatpush1.msra.mxu0 0.0
    %966 = vmatprep.subr.mxu0 0.0
    %967 = vmatpush1.msra.mxu0 0.0
    %968 = vmatprep.subr.mxu0 0.0
    %969 = vmatpush1.msra.mxu0 0.0
    %970 = vmatprep.subr.mxu0 0.0
    %971 = vmatpush1.msra.mxu0 0.0
    %972 = vmatprep.subr.mxu0 0.0
    %973 = vmatpush1.msra.mxu0 0.0
    %974 = vmatprep.subr.mxu0 0.0
    %975 = vmatpush1.msra.mxu0 0.0
    %976 = vmatprep.subr.mxu0 0.0
    %977 = vmatpush1.msra.mxu0 0.0
    %978 = vmatprep.subr.mxu0 0.0
    %979 = vmatpush1.msra.mxu0 0.0
    %980 = vmatprep.subr.mxu0 0.0
    %981 = vmatpush1.msra.mxu0 0.0
    %982 = vmatprep.subr.mxu0 0.0
    %983 = vmatpush1.msra.mxu0 0.0
    %984 = vmatprep.subr.mxu0 0.0
    %985 = vmatpush1.msra.mxu0 0.0
    %986 = vmatprep.subr.mxu0 0.0
    %987 = vmatpush1.msra.mxu0 0.0
    %988 = vmatprep.subr.mxu0 0.0
    %989 = vmatpush1.msra.mxu0 0.0
    %990 = vmatprep.subr.mxu0 0.0
    %991 = vmatpush1.msra.mxu0 0.0
    %992 = vmatprep.subr.mxu0 0.0
    %993 = vmatpush1.msra.mxu0 0.0
    %994 = vmatprep.mubr.f32.mxu0 0.0
    %995 = vmatmul.mubr.f32.gmra.mrb[0].mxu0 %v829
    %v996 = vpop.f32.mrb[0].mxu0
    %v997 = vadd.f32 %v827, %v996
    %v998 = vpop.f32.mrb[0].mxu0
    %999 = vmatprep.mubr.f32.mxu0 0.0
    %1000 = vmatmul.mubr.f32.gmra.mrb[0].mxu0 %v832
    %v1001 = vpop.f32.mrb[0].mxu0
    %v1002 = vadd.f32 %v827, %v1001
    %v1003 = vpop.f32.mrb[0].mxu0
    %1004 = vmatprep.mubr.f32.mxu0 0.0
    %1005 = vmatmul.mubr.f32.gmra.mrb[0].mxu0 %v835
    %v1006 = vpop.f32.mrb[0].mxu0
    %v1007 = vadd.f32 %v827, %v1006
    %v1008 = vpop.f32.mrb[0].mxu0
    %1009 = vmatprep.mubr.f32.mxu0 0.0
    %1010 = vmatmul.mubr.f32.gmra.mrb[0].mxu0 %v838
    %v1011 = vpop.f32.mrb[0].mxu0
    %v1012 = vadd.f32 %v827, %v1011
    %v1013 = vpop.f32.mrb[0].mxu0
    %1014 = vmatprep.mubr.f32.mxu0 0.0
    %1015 = vmatmul.mubr.f32.gmra.mrb[0].mxu0 %v841
    %v1016 = vpop.f32.mrb[0].mxu0
    %v1017 = vadd.f32 %v827, %v1016
    %v1018 = vpop.f32.mrb[0].mxu0
    %1019 = vmatprep.mubr.f32.mxu0 0.0
    %1020 = vmatmul.mubr.f32.gmra.mrb[0].mxu0 %v844
    %v1021 = vpop.f32.mrb[0].mxu0
    %v1022 = vadd.f32 %v827, %v1021
    %v1023 = vpop.f32.mrb[0].mxu0
    %1024 = vmatprep.mubr.f32.mxu0 0.0
    %1025 = vmatmul.mubr.f32.gmra.mrb[0].mxu0 %v847
    %v1026 = vpop.f32.mrb[0].mxu0
    %v1027 = vadd.f32 %v827, %v1026
    %v1028 = vpop.f32.mrb[0].mxu0
    %1029 = vmatprep.mubr.f32.mxu0 0.0
    %1030 = vmatmul.mubr.f32.gmra.mrb[0].mxu0 %v850
    %v1031 = vpop.f32.mrb[0].mxu0
    %v1032 = vadd.f32 %v827, %v1031
    %v1033 = vpop.f32.mrb[0].mxu0
    %1034 = vmatprep.mubr.f32.mxu0 0.0
    %1035 = vmatmul.mubr.f32.gmra.mrb[0].mxu0 %v853
    %v1036 = vpop.f32.mrb[0].mxu0
    %v1037 = vadd.f32 %v827, %v1036
    %v1038 = vpop.f32.mrb[0].mxu0
    %1039 = vmatprep.mubr.f32.mxu0 0.0
    %1040 = vmatmul.mubr.f32.gmra.mrb[0].mxu0 %v856
    %v1041 = vpop.f32.mrb[0].mxu0
    %v1042 = vadd.f32 %v827, %v1041
    %v1043 = vpop.f32.mrb[0].mxu0
    %1044 = vmatprep.mubr.f32.mxu0 0.0
    %1045 = vmatmul.mubr.f32.gmra.mrb[0].mxu0 %v859
    %v1046 = vpop.f32.mrb[0].mxu0
    %v1047 = vadd.f32 %v827, %v1046
    %v1048 = vpop.f32.mrb[0].mxu0
    %1049 = vmatprep.mubr.f32.mxu0 0.0
    %1050 = vmatmul.mubr.f32.gmra.mrb[0].mxu0 %v862
    %v1051 = vpop.f32.mrb[0].mxu0
    %v1052 = vadd.f32 %v827, %v1051
    %v1053 = vpop.f32.mrb[0].mxu0
    %1054 = vmatprep.mubr.f32.mxu0 0.0
    %1055 = vmatmul.mubr.f32.gmra.mrb[0].mxu0 %v865
    %v1056 = vpop.f32.mrb[0].mxu0
    %v1057 = vadd.f32 %v827, %v1056
    %v1058 = vpop.f32.mrb[0].mxu0
    %1059 = vmatprep.mubr.f32.mxu0 0.0
    %1060 = vmatmul.mubr.f32.gmra.mrb[0].mxu0 %v868
    %v1061 = vpop.f32.mrb[0].mxu0
    %v1062 = vadd.f32 %v827, %v1061
    %v1063 = vpop.f32.mrb[0].mxu0
    %1064 = vmatprep.mubr.f32.mxu0 0.0
    %1065 = vmatmul.mubr.f32.gmra.mrb[0].mxu0 %v871
    %v1066 = vpop.f32.mrb[0].mxu0
    %v1067 = vadd.f32 %v827, %v1066
    %v1068 = vpop.f32.mrb[0].mxu0
    %1069 = vmatprep.mubr.f32.mxu0 0.0
    %1070 = vmatmul.mubr.f32.gmra.mrb[0].mxu0 %v874
    %v1071 = vpop.f32.mrb[0].mxu0
    %v1072 = vadd.f32 %v827, %v1071
    %v1073 = vpop.f32.mrb[0].mxu0
    %1074 = vmatprep.mubr.f32.mxu0 0.0
    %1075 = vmatmul.mubr.f32.gmra.mrb[0].mxu0 %v877
    %v1076 = vpop.f32.mrb[0].mxu0
    %v1077 = vadd.f32 %v827, %v1076
    %v1078 = vpop.f32.mrb[0].mxu0
    %1079 = vmatprep.mubr.f32.mxu0 0.0
    %1080 = vmatmul.mubr.f32.gmra.mrb[0].mxu0 %v880
    %v1081 = vpop.f32.mrb[0].mxu0
    %v1082 = vadd.f32 %v827, %v1081
    %v1083 = vpop.f32.mrb[0].mxu0
    %1084 = vmatprep.mubr.f32.mxu0 0.0
    %1085 = vmatmul.mubr.f32.gmra.mrb[0].mxu0 %v883
    %v1086 = vpop.f32.mrb[0].mxu0
    %v1087 = vadd.f32 %v827, %v1086
    %v1088 = vpop.f32.mrb[0].mxu0
    %1089 = vmatprep.mubr.f32.mxu0 0.0
    %1090 = vmatmul.mubr.f32.gmra.mrb[0].mxu0 %v886
    %v1091 = vpop.f32.mrb[0].mxu0
    %v1092 = vadd.f32 %v827, %v1091
    %v1093 = vpop.f32.mrb[0].mxu0
    %1094 = vmatprep.mubr.f32.mxu0 0.0
    %1095 = vmatmul.mubr.f32.gmra.mrb[0].mxu0 %v889
    %v1096 = vpop.f32.mrb[0].mxu0
    %v1097 = vadd.f32 %v827, %v1096
    %v1098 = vpop.f32.mrb[0].mxu0
    %1099 = vmatprep.mubr.f32.mxu0 0.0
    %1100 = vmatmul.mubr.f32.gmra.mrb[0].mxu0 %v892
    %v1101 = vpop.f32.mrb[0].mxu0
    %v1102 = vadd.f32 %v827, %v1101
    %v1103 = vpop.f32.mrb[0].mxu0
    %1104 = vmatprep.mubr.f32.mxu0 0.0
    %1105 = vmatmul.mubr.f32.gmra.mrb[0].mxu0 %v895
    %v1106 = vpop.f32.mrb[0].mxu0
    %v1107 = vadd.f32 %v827, %v1106
    %v1108 = vpop.f32.mrb[0].mxu0
    %1109 = vmatprep.mubr.f32.mxu0 0.0
    %1110 = vmatmul.mubr.f32.gmra.mrb[0].mxu0 %v898
    %v1111 = vpop.f32.mrb[0].mxu0
    %v1112 = vadd.f32 %v827, %v1111
    %v1113 = vpop.f32.mrb[0].mxu0
    %1114 = vmatprep.mubr.f32.mxu0 0.0
    %1115 = vmatmul.mubr.f32.gmra.mrb[0].mxu0 %v901
    %v1116 = vpop.f32.mrb[0].mxu0
    %v1117 = vadd.f32 %v827, %v1116
    %v1118 = vpop.f32.mrb[0].mxu0
    %1119 = vmatprep.mubr.f32.mxu0 0.0
    %1120 = vmatmul.mubr.f32.gmra.mrb[0].mxu0 %v904
    %v1121 = vpop.f32.mrb[0].mxu0
    %v1122 = vadd.f32 %v827, %v1121
    %v1123 = vpop.f32.mrb[0].mxu0
    %1124 = vmatprep.mubr.f32.mxu0 0.0
    %1125 = vmatmul.mubr.f32.gmra.mrb[0].mxu0 %v907
    %v1126 = vpop.f32.mrb[0].mxu0
    %v1127 = vadd.f32 %v827, %v1126
    %v1128 = vpop.f32.mrb[0].mxu0
    %1129 = vmatprep.mubr.f32.mxu0 0.0
    %1130 = vmatmul.mubr.f32.gmra.mrb[0].mxu0 %v910
    %v1131 = vpop.f32.mrb[0].mxu0
    %v1132 = vadd.f32 %v827, %v1131
    %v1133 = vpop.f32.mrb[0].mxu0
    %1134 = vmatprep.mubr.f32.mxu0 0.0
    %1135 = vmatmul.mubr.f32.gmra.mrb[0].mxu0 %v913
    %v1136 = vpop.f32.mrb[0].mxu0
    %v1137 = vadd.f32 %v827, %v1136
    %v1138 = vpop.f32.mrb[0].mxu0
    %1139 = vmatprep.mubr.f32.mxu0 0.0
    %1140 = vmatmul.mubr.f32.gmra.mrb[0].mxu0 %v916
    %v1141 = vpop.f32.mrb[0].mxu0
    %v1142 = vadd.f32 %v827, %v1141
    %v1143 = vpop.f32.mrb[0].mxu0
    %1144 = vmatprep.mubr.f32.mxu0 0.0
    %1145 = vmatmul.mubr.f32.gmra.mrb[0].mxu0 %v919
    %v1146 = vpop.f32.mrb[0].mxu0
    %v1147 = vadd.f32 %v827, %v1146
    %v1148 = vpop.f32.mrb[0].mxu0
    %1149 = vmatprep.mubr.f32.mxu0 0.0
    %1150 = vmatmul.mubr.f32.gmra.mrb[0].mxu0 %v922
    %v1151 = vpop.f32.mrb[0].mxu0
    %v1152 = vadd.f32 %v827, %v1151
    %v1153 = vpop.f32.mrb[0].mxu0
    %1154 = vmatprep.mubr.f32.mxu0 0.0
    %1155 = vmatmul.mubr.f32.gmra.mrb[0].mxu0 %v925
    %v1156 = vpop.f32.mrb[0].mxu0
    %v1157 = vadd.f32 %v827, %v1156
    %v1158 = vpop.f32.mrb[0].mxu0
    %1159 = vmatprep.mubr.f32.mxu0 0.0
    %1160 = vmatmul.mubr.f32.gmra.mrb[0].mxu0 %v928
    %v1161 = vpop.f32.mrb[0].mxu0
    %v1162 = vadd.f32 %v827, %v1161
    %v1163 = vpop.f32.mrb[0].mxu0
    %1164 = vdwg.mxu0
    %v1165 = vld [vmem:[%s0] sm:$0xff]
    %v1166 = vld [vmem:[%s0 + $0x8] sm:$0xff]
    %1169 = vrot.lane.b32.xlu0 %v1165, 120
    %v1170 = vpop.permute.xlu0 %1169
    %1171 = vrot.lane.b32.xlu0 %v1166, 120
    %v1172 = vpop.permute.xlu0 %1171
    %v1175 = vsub.f32 %v997, %v1170
    %v1176 = vsub.f32 %v1002, %v1172
    %v1177 = vmul.f32 %v1175, %v1175
    %v1178 = vmul.f32 %v1176, %v1176
    %vm1179 = vcmask 7168
    %v1180 = vsel %vm1179, %v1177, 0.0
    %v1181 = vsel %vm1179, %v1178, 0.0
    %v1182 = vadd.f32 %v1180, %v1181
    %1183 = vadd.xlane.f32.xlu0 %v1182
    %v1184 = vpop.xlane.xlu0 %1183
    %v1185 = vrot.slane %v1184, 4
    %v1186 = vadd.f32 %v1184, %v1185
    %v1187 = vrot.slane %v1186, 2
    %v1188 = vadd.f32 %v1186, %v1187
    %v1189 = vrot.slane %v1188, 1
    %v1190 = vadd.f32 %v1188, %v1189
    %s1191 = vtos %v1190
    %s1192 = smul.f32 %s1191, 0.0625
    %1225 = vrot.lane.b32.xlu0 %v1007, 127
    %v1226 = vpop.permute.xlu0 %1225
    %1227 = vrot.lane.b32.xlu0 %v1012, 127
    %v1228 = vpop.permute.xlu0 %1227
    %1229 = vrot.lane.b32.xlu0 %v1017, 127
    %v1230 = vpop.permute.xlu0 %1229
    %1231 = vrot.lane.b32.xlu0 %v1022, 127
    %v1232 = vpop.permute.xlu0 %1231
    %1233 = vrot.lane.b32.xlu0 %v1027, 127
    %v1234 = vpop.permute.xlu0 %1233
    %1235 = vrot.lane.b32.xlu0 %v1032, 127
    %v1236 = vpop.permute.xlu0 %1235
    %1237 = vrot.lane.b32.xlu0 %v1037, 127
    %v1238 = vpop.permute.xlu0 %1237
    %1239 = vrot.lane.b32.xlu0 %v1042, 127
    %v1240 = vpop.permute.xlu0 %1239
    %1241 = vrot.lane.b32.xlu0 %v1047, 127
    %v1242 = vpop.permute.xlu0 %1241
    %1243 = vrot.lane.b32.xlu0 %v1052, 127
    %v1244 = vpop.permute.xlu0 %1243
    %1245 = vrot.lane.b32.xlu0 %v1057, 127
    %v1246 = vpop.permute.xlu0 %1245
    %1247 = vrot.lane.b32.xlu0 %v1062, 127
    %v1248 = vpop.permute.xlu0 %1247
    %1249 = vrot.lane.b32.xlu0 %v1067, 127
    %v1250 = vpop.permute.xlu0 %1249
    %1251 = vrot.lane.b32.xlu0 %v1072, 127
    %v1252 = vpop.permute.xlu0 %1251
    %1253 = vrot.lane.b32.xlu0 %v1077, 127
    %v1254 = vpop.permute.xlu0 %1253
    %1255 = vrot.lane.b32.xlu0 %v1082, 127
    %v1256 = vpop.permute.xlu0 %1255
    %1257 = vrot.lane.b32.xlu0 %v1087, 127
    %v1258 = vpop.permute.xlu0 %1257
    %1259 = vrot.lane.b32.xlu0 %v1092, 127
    %v1260 = vpop.permute.xlu0 %1259
    %1261 = vrot.lane.b32.xlu0 %v1097, 127
    %v1262 = vpop.permute.xlu0 %1261
    %1263 = vrot.lane.b32.xlu0 %v1102, 127
    %v1264 = vpop.permute.xlu0 %1263
    %1265 = vrot.lane.b32.xlu0 %v1107, 127
    %v1266 = vpop.permute.xlu0 %1265
    %1267 = vrot.lane.b32.xlu0 %v1112, 127
    %v1268 = vpop.permute.xlu0 %1267
    %1269 = vrot.lane.b32.xlu0 %v1117, 127
    %v1270 = vpop.permute.xlu0 %1269
    %1271 = vrot.lane.b32.xlu0 %v1122, 127
    %v1272 = vpop.permute.xlu0 %1271
    %1273 = vrot.lane.b32.xlu0 %v1127, 127
    %v1274 = vpop.permute.xlu0 %1273
    %1275 = vrot.lane.b32.xlu0 %v1132, 127
    %v1276 = vpop.permute.xlu0 %1275
    %1277 = vrot.lane.b32.xlu0 %v1137, 127
    %v1278 = vpop.permute.xlu0 %1277
    %1279 = vrot.lane.b32.xlu0 %v1142, 127
    %v1280 = vpop.permute.xlu0 %1279
    %1281 = vrot.lane.b32.xlu0 %v1147, 127
    %v1282 = vpop.permute.xlu0 %1281
    %1283 = vrot.lane.b32.xlu0 %v1152, 127
    %v1284 = vpop.permute.xlu0 %1283
    %1285 = vrot.lane.b32.xlu0 %v1157, 127
    %v1286 = vpop.permute.xlu0 %1285
    %1287 = vrot.lane.b32.xlu0 %v1162, 127
    %v1288 = vpop.permute.xlu0 %1287
    %v1321 = vmul.f32 %v1007, %v1226
    %v1322 = vmul.f32 %v1012, %v1228
    %v1323 = vmul.f32 %v1017, %v1230
    %v1324 = vmul.f32 %v1022, %v1232
    %v1325 = vmul.f32 %v1027, %v1234
    %v1326 = vmul.f32 %v1032, %v1236
    %v1327 = vmul.f32 %v1037, %v1238
    %v1328 = vmul.f32 %v1042, %v1240
    %v1329 = vmul.f32 %v1047, %v1242
    %v1330 = vmul.f32 %v1052, %v1244
    %v1331 = vmul.f32 %v1057, %v1246
    %v1332 = vmul.f32 %v1062, %v1248
    %v1333 = vmul.f32 %v1067, %v1250
    %v1334 = vmul.f32 %v1072, %v1252
    %v1335 = vmul.f32 %v1077, %v1254
    %v1336 = vmul.f32 %v1082, %v1256
    %v1337 = vmul.f32 %v1087, %v1258
    %v1338 = vmul.f32 %v1092, %v1260
    %v1339 = vmul.f32 %v1097, %v1262
    %v1340 = vmul.f32 %v1102, %v1264
    %v1341 = vmul.f32 %v1107, %v1266
    %v1342 = vmul.f32 %v1112, %v1268
    %v1343 = vmul.f32 %v1117, %v1270
    %v1344 = vmul.f32 %v1122, %v1272
    %v1345 = vmul.f32 %v1127, %v1274
    %v1346 = vmul.f32 %v1132, %v1276
    %v1347 = vmul.f32 %v1137, %v1278
    %v1348 = vmul.f32 %v1142, %v1280
    %v1349 = vmul.f32 %v1147, %v1282
    %v1350 = vmul.f32 %v1152, %v1284
    %v1351 = vmul.f32 %v1157, %v1286
    %v1352 = vmul.f32 %v1162, %v1288
    %v1353 = vsel %vm1179, %v1321, 0.0
    %v1354 = vsel %vm1179, %v1322, 0.0
    %v1355 = vadd.f32 %v1353, %v1354
    %v1356 = vsel %vm1179, %v1323, 0.0
    %v1357 = vadd.f32 %v1355, %v1356
    %v1358 = vsel %vm1179, %v1324, 0.0
    %v1359 = vadd.f32 %v1357, %v1358
    %v1360 = vsel %vm1179, %v1325, 0.0
    %v1361 = vadd.f32 %v1359, %v1360
    %v1362 = vsel %vm1179, %v1326, 0.0
    %v1363 = vadd.f32 %v1361, %v1362
    %v1364 = vsel %vm1179, %v1327, 0.0
    %v1365 = vadd.f32 %v1363, %v1364
    %v1366 = vsel %vm1179, %v1328, 0.0
    %v1367 = vadd.f32 %v1365, %v1366
    %v1368 = vsel %vm1179, %v1329, 0.0
    %v1369 = vadd.f32 %v1367, %v1368
    %v1370 = vsel %vm1179, %v1330, 0.0
    %v1371 = vadd.f32 %v1369, %v1370
    %v1372 = vsel %vm1179, %v1331, 0.0
    %v1373 = vadd.f32 %v1371, %v1372
    %v1374 = vsel %vm1179, %v1332, 0.0
    %v1375 = vadd.f32 %v1373, %v1374
    %v1376 = vsel %vm1179, %v1333, 0.0
    %v1377 = vadd.f32 %v1375, %v1376
    %v1378 = vsel %vm1179, %v1334, 0.0
    %v1379 = vadd.f32 %v1377, %v1378
    %v1380 = vsel %vm1179, %v1335, 0.0
    %v1381 = vadd.f32 %v1379, %v1380
    %v1382 = vsel %vm1179, %v1336, 0.0
    %v1383 = vadd.f32 %v1381, %v1382
    %v1384 = vsel %vm1179, %v1337, 0.0
    %v1385 = vadd.f32 %v1383, %v1384
    %v1386 = vsel %vm1179, %v1338, 0.0
    %v1387 = vadd.f32 %v1385, %v1386
    %v1388 = vsel %vm1179, %v1339, 0.0
    %v1389 = vadd.f32 %v1387, %v1388
    %v1390 = vsel %vm1179, %v1340, 0.0
    %v1391 = vadd.f32 %v1389, %v1390
    %v1392 = vsel %vm1179, %v1341, 0.0
    %v1393 = vadd.f32 %v1391, %v1392
    %v1394 = vsel %vm1179, %v1342, 0.0
    %v1395 = vadd.f32 %v1393, %v1394
    %v1396 = vsel %vm1179, %v1343, 0.0
    %v1397 = vadd.f32 %v1395, %v1396
    %v1398 = vsel %vm1179, %v1344, 0.0
    %v1399 = vadd.f32 %v1397, %v1398
    %v1400 = vsel %vm1179, %v1345, 0.0
    %v1401 = vadd.f32 %v1399, %v1400
    %v1402 = vsel %vm1179, %v1346, 0.0
    %v1403 = vadd.f32 %v1401, %v1402
    %v1404 = vsel %vm1179, %v1347, 0.0
    %v1405 = vadd.f32 %v1403, %v1404
    %v1406 = vsel %vm1179, %v1348, 0.0
    %v1407 = vadd.f32 %v1405, %v1406
    %v1408 = vsel %vm1179, %v1349, 0.0
    %v1409 = vadd.f32 %v1407, %v1408
    %v1410 = vsel %vm1179, %v1350, 0.0
    %v1411 = vadd.f32 %v1409, %v1410
    %v1412 = vsel %vm1179, %v1351, 0.0
    %v1413 = vadd.f32 %v1411, %v1412
    %v1414 = vsel %vm1179, %v1352, 0.0
    %v1415 = vadd.f32 %v1413, %v1414
    %1416 = vadd.xlane.f32.xlu0 %v1415
    %v1417 = vpop.xlane.xlu0 %1416
    %v1418 = vrot.slane %v1417, 4
    %v1419 = vadd.f32 %v1417, %v1418
    %v1420 = vrot.slane %v1419, 2
    %v1421 = vadd.f32 %v1419, %v1420
    %v1422 = vrot.slane %v1421, 1
    %v1423 = vadd.f32 %v1421, %v1422
    %s1424 = vtos %v1423
    %s1425 = smul.f32 %s1424, 0.00390625
    %v1426 = vmul.f32 %v1007, %v1007
    %v1427 = vmul.f32 %v1012, %v1012
    %v1428 = vmul.f32 %v1017, %v1017
    %v1429 = vmul.f32 %v1022, %v1022
    %v1430 = vmul.f32 %v1027, %v1027
    %v1431 = vmul.f32 %v1032, %v1032
    %v1432 = vmul.f32 %v1037, %v1037
    %v1433 = vmul.f32 %v1042, %v1042
    %v1434 = vmul.f32 %v1047, %v1047
    %v1435 = vmul.f32 %v1052, %v1052
    %v1436 = vmul.f32 %v1057, %v1057
    %v1437 = vmul.f32 %v1062, %v1062
    %v1438 = vmul.f32 %v1067, %v1067
    %v1439 = vmul.f32 %v1072, %v1072
    %v1440 = vmul.f32 %v1077, %v1077
    %v1441 = vmul.f32 %v1082, %v1082
    %v1442 = vmul.f32 %v1087, %v1087
    %v1443 = vmul.f32 %v1092, %v1092
    %v1444 = vmul.f32 %v1097, %v1097
    %v1445 = vmul.f32 %v1102, %v1102
    %v1446 = vmul.f32 %v1107, %v1107
    %v1447 = vmul.f32 %v1112, %v1112
    %v1448 = vmul.f32 %v1117, %v1117
    %v1449 = vmul.f32 %v1122, %v1122
    %v1450 = vmul.f32 %v1127, %v1127
    %v1451 = vmul.f32 %v1132, %v1132
    %v1452 = vmul.f32 %v1137, %v1137
    %v1453 = vmul.f32 %v1142, %v1142
    %v1454 = vmul.f32 %v1147, %v1147
    %v1455 = vmul.f32 %v1152, %v1152
    %v1456 = vmul.f32 %v1157, %v1157
    %v1457 = vmul.f32 %v1162, %v1162
    %1490 = vrot.lane.b32.xlu0 %v1426, 127
    %v1491 = vpop.permute.xlu0 %1490
    %1492 = vrot.lane.b32.xlu0 %v1427, 127
    %v1493 = vpop.permute.xlu0 %1492
    %1494 = vrot.lane.b32.xlu0 %v1428, 127
    %v1495 = vpop.permute.xlu0 %1494
    %1496 = vrot.lane.b32.xlu0 %v1429, 127
    %v1497 = vpop.permute.xlu0 %1496
    %1498 = vrot.lane.b32.xlu0 %v1430, 127
    %v1499 = vpop.permute.xlu0 %1498
    %1500 = vrot.lane.b32.xlu0 %v1431, 127
    %v1501 = vpop.permute.xlu0 %1500
    %1502 = vrot.lane.b32.xlu0 %v1432, 127
    %v1503 = vpop.permute.xlu0 %1502
    %1504 = vrot.lane.b32.xlu0 %v1433, 127
    %v1505 = vpop.permute.xlu0 %1504
    %1506 = vrot.lane.b32.xlu0 %v1434, 127
    %v1507 = vpop.permute.xlu0 %1506
    %1508 = vrot.lane.b32.xlu0 %v1435, 127
    %v1509 = vpop.permute.xlu0 %1508
    %1510 = vrot.lane.b32.xlu0 %v1436, 127
    %v1511 = vpop.permute.xlu0 %1510
    %1512 = vrot.lane.b32.xlu0 %v1437, 127
    %v1513 = vpop.permute.xlu0 %1512
    %1514 = vrot.lane.b32.xlu0 %v1438, 127
    %v1515 = vpop.permute.xlu0 %1514
    %1516 = vrot.lane.b32.xlu0 %v1439, 127
    %v1517 = vpop.permute.xlu0 %1516
    %1518 = vrot.lane.b32.xlu0 %v1440, 127
    %v1519 = vpop.permute.xlu0 %1518
    %1520 = vrot.lane.b32.xlu0 %v1441, 127
    %v1521 = vpop.permute.xlu0 %1520
    %1522 = vrot.lane.b32.xlu0 %v1442, 127
    %v1523 = vpop.permute.xlu0 %1522
    %1524 = vrot.lane.b32.xlu0 %v1443, 127
    %v1525 = vpop.permute.xlu0 %1524
    %1526 = vrot.lane.b32.xlu0 %v1444, 127
    %v1527 = vpop.permute.xlu0 %1526
    %1528 = vrot.lane.b32.xlu0 %v1445, 127
    %v1529 = vpop.permute.xlu0 %1528
    %1530 = vrot.lane.b32.xlu0 %v1446, 127
    %v1531 = vpop.permute.xlu0 %1530
    %1532 = vrot.lane.b32.xlu0 %v1447, 127
    %v1533 = vpop.permute.xlu0 %1532
    %1534 = vrot.lane.b32.xlu0 %v1448, 127
    %v1535 = vpop.permute.xlu0 %1534
    %1536 = vrot.lane.b32.xlu0 %v1449, 127
    %v1537 = vpop.permute.xlu0 %1536
    %1538 = vrot.lane.b32.xlu0 %v1450, 127
    %v1539 = vpop.permute.xlu0 %1538
    %1540 = vrot.lane.b32.xlu0 %v1451, 127
    %v1541 = vpop.permute.xlu0 %1540
    %1542 = vrot.lane.b32.xlu0 %v1452, 127
    %v1543 = vpop.permute.xlu0 %1542
    %1544 = vrot.lane.b32.xlu0 %v1453, 127
    %v1545 = vpop.permute.xlu0 %1544
    %1546 = vrot.lane.b32.xlu0 %v1454, 127
    %v1547 = vpop.permute.xlu0 %1546
    %1548 = vrot.lane.b32.xlu0 %v1455, 127
    %v1549 = vpop.permute.xlu0 %1548
    %1550 = vrot.lane.b32.xlu0 %v1456, 127
    %v1551 = vpop.permute.xlu0 %1550
    %1552 = vrot.lane.b32.xlu0 %v1457, 127
    %v1553 = vpop.permute.xlu0 %1552
    %v1586 = vsel %vm1179, %v1491, 0.0
    %v1587 = vsel %vm1179, %v1493, 0.0
    %v1588 = vadd.f32 %v1586, %v1587
    %v1589 = vsel %vm1179, %v1495, 0.0
    %v1590 = vadd.f32 %v1588, %v1589
    %v1591 = vsel %vm1179, %v1497, 0.0
    %v1592 = vadd.f32 %v1590, %v1591
    %v1593 = vsel %vm1179, %v1499, 0.0
    %v1594 = vadd.f32 %v1592, %v1593
    %v1595 = vsel %vm1179, %v1501, 0.0
    %v1596 = vadd.f32 %v1594, %v1595
    %v1597 = vsel %vm1179, %v1503, 0.0
    %v1598 = vadd.f32 %v1596, %v1597
    %v1599 = vsel %vm1179, %v1505, 0.0
    %v1600 = vadd.f32 %v1598, %v1599
    %v1601 = vsel %vm1179, %v1507, 0.0
    %v1602 = vadd.f32 %v1600, %v1601
    %v1603 = vsel %vm1179, %v1509, 0.0
    %v1604 = vadd.f32 %v1602, %v1603
    %v1605 = vsel %vm1179, %v1511, 0.0
    %v1606 = vadd.f32 %v1604, %v1605
    %v1607 = vsel %vm1179, %v1513, 0.0
    %v1608 = vadd.f32 %v1606, %v1607
    %v1609 = vsel %vm1179, %v1515, 0.0
    %v1610 = vadd.f32 %v1608, %v1609
    %v1611 = vsel %vm1179, %v1517, 0.0
    %v1612 = vadd.f32 %v1610, %v1611
    %v1613 = vsel %vm1179, %v1519, 0.0
    %v1614 = vadd.f32 %v1612, %v1613
    %v1615 = vsel %vm1179, %v1521, 0.0
    %v1616 = vadd.f32 %v1614, %v1615
    %v1617 = vsel %vm1179, %v1523, 0.0
    %v1618 = vadd.f32 %v1616, %v1617
    %v1619 = vsel %vm1179, %v1525, 0.0
    %v1620 = vadd.f32 %v1618, %v1619
    %v1621 = vsel %vm1179, %v1527, 0.0
    %v1622 = vadd.f32 %v1620, %v1621
    %v1623 = vsel %vm1179, %v1529, 0.0
    %v1624 = vadd.f32 %v1622, %v1623
    %v1625 = vsel %vm1179, %v1531, 0.0
    %v1626 = vadd.f32 %v1624, %v1625
    %v1627 = vsel %vm1179, %v1533, 0.0
    %v1628 = vadd.f32 %v1626, %v1627
    %v1629 = vsel %vm1179, %v1535, 0.0
    %v1630 = vadd.f32 %v1628, %v1629
    %v1631 = vsel %vm1179, %v1537, 0.0
    %v1632 = vadd.f32 %v1630, %v1631
    %v1633 = vsel %vm1179, %v1539, 0.0
    %v1634 = vadd.f32 %v1632, %v1633
    %v1635 = vsel %vm1179, %v1541, 0.0
    %v1636 = vadd.f32 %v1634, %v1635
    %v1637 = vsel %vm1179, %v1543, 0.0
    %v1638 = vadd.f32 %v1636, %v1637
    %v1639 = vsel %vm1179, %v1545, 0.0
    %v1640 = vadd.f32 %v1638, %v1639
    %v1641 = vsel %vm1179, %v1547, 0.0
    %v1642 = vadd.f32 %v1640, %v1641
    %v1643 = vsel %vm1179, %v1549, 0.0
    %v1644 = vadd.f32 %v1642, %v1643
    %v1645 = vsel %vm1179, %v1551, 0.0
    %v1646 = vadd.f32 %v1644, %v1645
    %v1647 = vsel %vm1179, %v1553, 0.0
    %v1648 = vadd.f32 %v1646, %v1647
    %1649 = vadd.xlane.f32.xlu0 %v1648
    %v1650 = vpop.xlane.xlu0 %1649
    %v1651 = vrot.slane %v1650, 4
    %v1652 = vadd.f32 %v1650, %v1651
    %v1653 = vrot.slane %v1652, 2
    %v1654 = vadd.f32 %v1652, %v1653
    %v1655 = vrot.slane %v1654, 1
    %v1656 = vadd.f32 %v1654, %v1655
    %s1657 = vtos %v1656
    %s1658 = smul.f32 %s1657, 0.00390625
    %s1659 = sadd.f32 %s1658, 1e-12
    %s1660 = smul.f32 %s1425, %s1425
    %v1661 = vstv %s1659
    %v1662 = vrcp.pop %v1661
    %s1663 = vtos %v1662
    %s1664 = smul.f32 %s1660, %s1663
    %v1665 = vld [vmem:[%s1] sm:$0xff]
    %v1666 = vld [vmem:[%s1 + $0x8] sm:$0xff]
    %v1667 = vld [vmem:[%s3] sm:$0xff]
    %v1668 = vmul.f32 %v1665, %v1665
    %v1669 = vmul.f32 %v1666, %v1666
    %v1670 = vmul.f32 %v430, %v430
    %v1671 = vmul.f32 %v431, %v431
    %v1672 = vmul.f32 %v432, %v432
    %v1673 = vmul.f32 %v433, %v433
    %v1674 = vmul.f32 %v434, %v434
    %v1675 = vmul.f32 %v435, %v435
    %v1676 = vmul.f32 %v436, %v436
    %v1677 = vmul.f32 %v437, %v437
    %vm1678 = vcmask 654336
    %v1680 = vsel %vm1678, %v1667, 0
    %1682 = vmatprep.subr.mxu0 0.0
    %1683 = vmatpush1.msra.mxu0 %v1668
    %1684 = vmatprep.subr.mxu0 0.0
    %1685 = vmatpush1.msra.mxu0 %v1669
    %1686 = vmatprep.subr.mxu0 0.0
    %1687 = vmatpush1.msra.mxu0 %v1670
    %1688 = vmatprep.subr.mxu0 0.0
    %1689 = vmatpush1.msra.mxu0 %v1671
    %1690 = vmatprep.subr.mxu0 0.0
    %1691 = vmatpush1.msra.mxu0 %v1672
    %1692 = vmatprep.subr.mxu0 0.0
    %1693 = vmatpush1.msra.mxu0 %v1673
    %1694 = vmatprep.subr.mxu0 0.0
    %1695 = vmatpush1.msra.mxu0 %v1674
    %1696 = vmatprep.subr.mxu0 0.0
    %1697 = vmatpush1.msra.mxu0 %v1675
    %1698 = vmatprep.subr.mxu0 0.0
    %1699 = vmatpush1.msra.mxu0 %v1676
    %1700 = vmatprep.subr.mxu0 0.0
    %1701 = vmatpush1.msra.mxu0 %v1677
    %1702 = vmatprep.subr.mxu0 0.0
    %1703 = vmatpush1.msra.mxu0 0.0
    %1704 = vmatprep.subr.mxu0 0.0
    %1705 = vmatpush1.msra.mxu0 0.0
    %1706 = vmatprep.subr.mxu0 0.0
    %1707 = vmatpush1.msra.mxu0 0.0
    %1708 = vmatprep.subr.mxu0 0.0
    %1709 = vmatpush1.msra.mxu0 0.0
    %1710 = vmatprep.subr.mxu0 0.0
    %1711 = vmatpush1.msra.mxu0 0.0
    %1712 = vmatprep.subr.mxu0 0.0
    %1713 = vmatpush1.msra.mxu0 0.0
    %1714 = vmatprep.subr.mxu0 0.0
    %1715 = vmatpush1.msra.mxu0 0.0
    %1716 = vmatprep.subr.mxu0 0.0
    %1717 = vmatpush1.msra.mxu0 0.0
    %1718 = vmatprep.subr.mxu0 0.0
    %1719 = vmatpush1.msra.mxu0 0.0
    %1720 = vmatprep.subr.mxu0 0.0
    %1721 = vmatpush1.msra.mxu0 0.0
    %1722 = vmatprep.subr.mxu0 0.0
    %1723 = vmatpush1.msra.mxu0 0.0
    %1724 = vmatprep.subr.mxu0 0.0
    %1725 = vmatpush1.msra.mxu0 0.0
    %1726 = vmatprep.subr.mxu0 0.0
    %1727 = vmatpush1.msra.mxu0 0.0
    %1728 = vmatprep.subr.mxu0 0.0
    %1729 = vmatpush1.msra.mxu0 0.0
    %1730 = vmatprep.subr.mxu0 0.0
    %1731 = vmatpush1.msra.mxu0 0.0
    %1732 = vmatprep.subr.mxu0 0.0
    %1733 = vmatpush1.msra.mxu0 0.0
    %1734 = vmatprep.subr.mxu0 0.0
    %1735 = vmatpush1.msra.mxu0 0.0
    %1736 = vmatprep.subr.mxu0 0.0
    %1737 = vmatpush1.msra.mxu0 0.0
    %1738 = vmatprep.subr.mxu0 0.0
    %1739 = vmatpush1.msra.mxu0 0.0
    %1740 = vmatprep.subr.mxu0 0.0
    %1741 = vmatpush1.msra.mxu0 0.0
    %1742 = vmatprep.subr.mxu0 0.0
    %1743 = vmatpush1.msra.mxu0 0.0
    %1744 = vmatprep.subr.mxu0 0.0
    %1745 = vmatpush1.msra.mxu0 0.0
    %1746 = vmatprep.mubr.f32.mxu0 0.0
    %1747 = vmatmul.mubr.f32.gmra.mrb[0].mxu0 %v1680
    %v1748 = vpop.f32.mrb[0].mxu0
    %v1749 = vadd.f32 0.0, %v1748
    %v1750 = vpop.f32.mrb[0].mxu0
    %1751 = vdwg.mxu0
    %vm1752 = vcmask 261120
    %v1753 = vsel %vm1752, %v1749, 0.0
    %1754 = vadd.xlane.f32.xlu0 %v1753
    %v1755 = vpop.xlane.xlu0 %1754
    %1757 = vrot.lane.b32.xlu0 %v1749, 96
    %v1758 = vpop.permute.xlu0 %1757
    %v1760 = vsel %vm1752, %v1758, 0.0
    %1761 = vadd.xlane.f32.xlu0 %v1760
    %v1762 = vpop.xlane.xlu0 %1761
    %vm1763 = vcmp.gt.f32.partialorder %v1755, 0.0
    %v1764 = vmax.f32 %v1755, 1e-30
    %v1765 = vrsqrt.pop %v1764
    %v1766 = vmul.f32 %v1764, %v1765
    %vm1767 = vcmp.eq.f32.partialorder %v1764, inf
    %v1768 = vsel %vm1767, %v1764, %v1766
    %vm1769 = vcmp.eq.f32.partialorder %v1764, 0.0
    %v1770 = vand.u32 %v1764, 2147483648
    %v1771 = vsel %vm1769, %v1770, %v1768
    %v1772 = vsel %vm1763, %v1771, 0.0
    %v1773 = vsel %vm1179, %v1772, 0.0
    %1774 = vadd.xlane.f32.xlu0 %v1773
    %v1775 = vpop.xlane.xlu0 %1774
    %v1776 = vrot.slane %v1775, 4
    %v1777 = vadd.f32 %v1775, %v1776
    %v1778 = vrot.slane %v1777, 2
    %v1779 = vadd.f32 %v1777, %v1778
    %v1780 = vrot.slane %v1779, 1
    %v1781 = vadd.f32 %v1779, %v1780
    %s1782 = vtos %v1781
    %vm1783 = vcmp.gt.f32.partialorder %v1762, 0.0
    %v1784 = vmax.f32 %v1762, 1e-30
    %v1785 = vrsqrt.pop %v1784
    %v1786 = vmul.f32 %v1784, %v1785
    %vm1787 = vcmp.eq.f32.partialorder %v1784, inf
    %v1788 = vsel %vm1787, %v1784, %v1786
    %vm1789 = vcmp.eq.f32.partialorder %v1784, 0.0
    %v1790 = vand.u32 %v1784, 2147483648
    %v1791 = vsel %vm1789, %v1790, %v1788
    %v1792 = vsel %vm1783, %v1791, 0.0
    %v1793 = vsel %vm1179, %v1792, 0.0
    %1794 = vadd.xlane.f32.xlu0 %v1793
    %v1795 = vpop.xlane.xlu0 %1794
    %v1796 = vrot.slane %v1795, 4
    %v1797 = vadd.f32 %v1795, %v1796
    %v1798 = vrot.slane %v1797, 2
    %v1799 = vadd.f32 %v1797, %v1798
    %v1800 = vrot.slane %v1799, 1
    %v1801 = vadd.f32 %v1799, %v1800
    %s1802 = vtos %v1801
    %s1803 = smul.f32 %s1192, 10.0
    %s1804 = sadd.f32 %s1803, %s1664
    %s1805 = smul.f32 %s1782, 0.0001
    %s1806 = sadd.f32 %s1804, %s1805
    %s1807 = smul.f32 %s1802, 0.0001
    %s1808 = sadd.f32 %s1806, %s1807
    %s1809 = scalar_lea.smem [#allocation2], 0
    %1810 = sst [smem:[%s1809]] %s1808
    %s1811 = scalar_lea.smem [#allocation2], 1
    %1812 = sst [smem:[%s1811]] %s1192
    %s1813 = scalar_lea.smem [#allocation2], 2
    %1814 = sst [smem:[%s1813]] %s1664
    %s1815 = scalar_lea.smem [#allocation2], 3
    %1816 = sst [smem:[%s1815]] %s1660
    // Predicated region
    $region18: #{custom_loss_packed.1} parent=1 // pred_check
      _
    $region19: #{custom_loss_packed.1} parent=1 // pred_check_branch
      %1818 = sbr.rel (0) target = $region21
    $region20: #{custom_loss_packed.1} parent=1 // pred_region
      %s1820 = ssub.s32 16, 16
      %1821 = vsyncadd [#allocation3], %s1820
      %s1823 = sshll.u32 %s4, 4
      %s1824 = int_to_ptr.vmem [resolvable:$true] %s1823
      %1826 = dma.smem_to_vmem [#allocation2], 16, %s1824, [#allocation3]
    $region21: #{custom_loss_packed.1} parent=1 // pred_fallthru
      _
    // Predicated region
    $region22: #{custom_loss_packed.1} parent=1 // pred_check
      _
    $region23: #{custom_loss_packed.1} parent=1 // pred_check_branch
      %1828 = sbr.rel (0) target = $region25
    $region24: #{custom_loss_packed.1} parent=1 // pred_region
      %1829 = dma.done [#allocation3], 16
    $region25: #{custom_loss_packed.1} parent=1 // pred_fallthru
      _
    %1830 = sfence
    %1831 = vsyncpa [#allocation3], 1

</llo_original>
